<compile_context>
chip_gen: v7x
topology: tpu7x:2x2x1
jax: 0.10.0
libtpu: 0.0.40
codegen_flags: <defaults>
</compile_context>

<pallas_src>
import functools

import jax
import jax.numpy as jnp
from jax import lax
from jax.experimental import pallas as pl
from jax.experimental.pallas import tpu as pltpu

# ---- model config (small demo shapes consistent with the module) ----
BATCH = 2
SEQ = 8           # n_tokens (== context_length here)
D_IN = 32
D_OUT = 32
NUM_HEADS = 4
HEAD_DIM = D_OUT // NUM_HEADS
DROPOUT = 0.0     # nn.Dropout is identity in eval mode / p == 0


def mha_kernel(x_ref, wqkv_ref, wo_ref, bo_ref, o_ref, *, num_heads, head_dim):
    """One grid step == one batch element (grid axis marked "parallel").

    x_ref    : (T, d_in)         bf16  activation tile for this batch element
    wqkv_ref : (3*H, d_in, hd)   bf16  head-major fused [q|k|v] projections
    wo_ref   : (H, hd, d_out)    bf16  head-major output-projection weights
    bo_ref   : (1, d_out)        f32   output-projection bias
    o_ref    : (T, d_out)              output tile for this batch element
    """
    seq_len = x_ref.shape[0]
    h = num_heads

    x = x_ref[...]                                               # (T, d_in) bf16

    # Head-major fused QKV projection: one batched MXU call producing
    # (3H, T, hd) directly, so per-head data lives on the leading (batch)
    # axis instead of 8-lane sub-slices of a 128-lane vreg.
    xb = jnp.broadcast_to(x[None], (3 * h,) + x.shape)           # (3H, T, d_in)
    qkv = lax.dot_general(
        xb, wqkv_ref[...],
        dimension_numbers=(((2,), (1,)), ((0,), (0,))),
        preferred_element_type=jnp.float32)                      # (3H, T, hd) f32
    q = qkv[0 * h:1 * h].astype(jnp.bfloat16)                    # (H, T, hd)
    k = qkv[1 * h:2 * h].astype(jnp.bfloat16)
    v = qkv[2 * h:3 * h].astype(jnp.bfloat16)

    scale = 1.0 / (head_dim ** 0.5)

    # Scores for all heads with one head-batched matmul.
    s = jnp.einsum("hqd,hkd->hqk", q, k,
                   preferred_element_type=jnp.float32) * scale   # (H, T, T) f32

    # Per-batch causal mask; finite fill keeps exp() NaN-safe.
    rows = lax.broadcasted_iota(jnp.int32, (seq_len, seq_len), 0)
    cols = lax.broadcasted_iota(jnp.int32, (seq_len, seq_len), 1)
    keep = jnp.broadcast_to((cols <= rows)[None], s.shape)
    s = jnp.where(keep, s, jnp.float32(-1e30))

    # Numerically-stable softmax in f32; reciprocal goes to the idle EUP slot.
    m = jnp.max(s, axis=-1, keepdims=True)
    p = jnp.exp(s - m)
    denom = jnp.sum(p, axis=-1, keepdims=True)
    p = p * pl.reciprocal(denom, approx=True)
    # TODO(synk): dropout on p for training mode (identity at inference / p=0).

    # PV for all heads with one head-batched matmul.
    ctx = jnp.einsum("hqk,hkd->hqd", p.astype(jnp.bfloat16), v,
                     preferred_element_type=jnp.float32)         # (H, T, hd) f32

    # Output projection, head-major: batched (T,hd)@(hd,d_out) then a
    # leading-axis sum folds the heads -- no lane-axis concat / relayout.
    out_h = lax.dot_general(
        ctx.astype(jnp.bfloat16), wo_ref[...],
        dimension_numbers=(((2,), (1,)), ((0,), (0,))),
        preferred_element_type=jnp.float32)                      # (H, T, d_out)
    out = jnp.sum(out_h, axis=0) + bo_ref[...]                   # (T, d_out) f32

    o_ref[...] = out.astype(o_ref.dtype)


@jax.jit
def mha_pallas(x, wq_t, wk_t, wv_t, wo_t, bo):
    B, T, d_in = x.shape
    d_out = wq_t.shape[1]
    H, hd = NUM_HEADS, HEAD_DIM

    # Head-major weight layout prepared once in the wrapper (layout plumbing
    # stays out of the kernel).  bf16 operands, f32 accumulation in-kernel.
    def split_heads(w):                       # (d_in, d_out) -> (H, d_in, hd)
        return w.reshape(d_in, H, hd).transpose(1, 0, 2)

    wqkv3 = jnp.concatenate(
        [split_heads(wq_t), split_heads(wk_t), split_heads(wv_t)],
        axis=0).astype(jnp.bfloat16)                          # (3H, d_in, hd)
    wo3 = wo_t.reshape(H, hd, d_out).astype(jnp.bfloat16)     # (H, hd, d_out)
    x_b = x.astype(jnp.bfloat16)

    kernel = functools.partial(mha_kernel, num_heads=H, head_dim=hd)

    out = pl.pallas_call(
        kernel,
        out_shape=jax.ShapeDtypeStruct((B, T, d_out), jnp.float32),
        grid=(B,),
        in_specs=[
            pl.BlockSpec((None, T, d_in), lambda b: (b, 0, 0)),    # x: per-batch tile
            pl.BlockSpec((3 * H, d_in, hd), lambda b: (0, 0, 0)),  # Wqkv: resident
            pl.BlockSpec((H, hd, d_out), lambda b: (0, 0, 0)),     # Wo:   resident
            pl.BlockSpec((1, d_out), lambda b: (0, 0)),            # bias: resident
        ],
        out_specs=pl.BlockSpec((None, T, d_out), lambda b: (b, 0, 0)),
        compiler_params=pltpu.CompilerParams(
            dimension_semantics=("parallel",)),   # second TensorCore on v7x
    )(x_b, wqkv3, wo3, bo)

    return out


def mha_reference(x, wq_t, wk_t, wv_t, wo_t, bo):
    """Pure-JAX f32 reference mirroring the PyTorch forward (dropout = identity)."""
    B, T, _ = x.shape
    q = x @ wq_t
    k = x @ wk_t
    v = x @ wv_t
    q = q.reshape(B, T, NUM_HEADS, HEAD_DIM).transpose(0, 2, 1, 3)
    k = k.reshape(B, T, NUM_HEADS, HEAD_DIM).transpose(0, 2, 1, 3)
    v = v.reshape(B, T, NUM_HEADS, HEAD_DIM).transpose(0, 2, 1, 3)
    s = jnp.einsum("bhqd,bhkd->bhqk", q, k)
    mask = jnp.triu(jnp.ones((T, T), dtype=bool), k=1)
    s = jnp.where(mask[None, None], -jnp.inf, s)
    w = jax.nn.softmax(s / (HEAD_DIM ** 0.5), axis=-1)
    ctx = jnp.einsum("bhqk,bhkd->bhqd", w, v).transpose(0, 2, 1, 3).reshape(B, T, D_OUT)
    return ctx @ wo_t + bo


if __name__ == "__main__":
    key = jax.random.PRNGKey(0)
    kx, kq, kk, kv, ko, kb = jax.random.split(key, 6)

    # Input
    x = jax.random.normal(kx, (BATCH, SEQ, D_IN), dtype=jnp.float32)

    # Deterministic parameter init (nn.Linear-style, stored transposed: (in, out)).
    # qkv_bias=False -> no q/k/v biases; out_proj has weight + bias.
    def init_linear(k, fan_in, fan_out):
        bound = 1.0 / (fan_in ** 0.5)
        return jax.random.uniform(k, (fan_in, fan_out), jnp.float32, -bound, bound)

    wq_t = init_linear(kq, D_IN, D_OUT)
    wk_t = init_linear(kk, D_IN, D_OUT)
    wv_t = init_linear(kv, D_IN, D_OUT)
    wo_t = init_linear(ko, D_OUT, D_OUT)
    bo = jax.random.uniform(kb, (1, D_OUT), jnp.float32,
                            -1.0 / (D_OUT ** 0.5), 1.0 / (D_OUT ** 0.5))

    out = mha_pallas(x, wq_t, wk_t, wv_t, wo_t, bo)
    out = jax.block_until_ready(out)

    ref = mha_reference(x, wq_t, wk_t, wv_t, wo_t, bo)
    assert out.shape == (BATCH, SEQ, D_OUT), out.shape
    # Tolerance loosened vs. the all-f32 version: matmul operands are bf16
    # (f32 accumulation), per the perf review.
    assert jnp.allclose(out, ref, atol=5e-2, rtol=5e-2), "mismatch vs reference"

    print("KERNEL_OK")
</pallas_src>

<mosaic_0001>
module attributes {stable_mosaic.version = 11 : i64} {
  func.func @mha_kernel(%arg0: i32, %arg1: memref<1x8x32xbf16, #tpu.memory_space<vmem>>, %arg2: memref<12x32x8xbf16, #tpu.memory_space<vmem>>, %arg3: memref<4x8x32xbf16, #tpu.memory_space<vmem>>, %arg4: memref<1x32xf32, #tpu.memory_space<vmem>>, %arg5: memref<1x8x32xf32, #tpu.memory_space<vmem>>) attributes {dimension_semantics = [#tpu.dimension_semantics<parallel>], iteration_bounds = array<i64: 2>, scalar_prefetch = 0 : i64, scratch_operands = 0 : i64, tpu.core_type = #tpu.core_type<tc>, window_params = [{transform_indices = @transform_0, window_bounds = array<i64: 1, 8, 32>}, {pipeline_mode = #tpu.pipeline_mode<synchronous>, transform_indices = @transform_1, window_bounds = array<i64: 12, 32, 8>}, {pipeline_mode = #tpu.pipeline_mode<synchronous>, transform_indices = @transform_2, window_bounds = array<i64: 4, 8, 32>}, {pipeline_mode = #tpu.pipeline_mode<synchronous>, transform_indices = @transform_3, window_bounds = array<i64: 1, 32>}, {transform_indices = @transform_4, window_bounds = array<i64: 1, 8, 32>}]} {
    %c0 = arith.constant 0 : index
    %c0_0 = arith.constant 0 : index
    %c0_1 = arith.constant 0 : index
    %0 = vector.load %arg1[%c0, %c0_0, %c0_1] : memref<1x8x32xbf16, #tpu.memory_space<vmem>>, vector<1x8x32xbf16>
    %1 = vector.shape_cast %0 : vector<1x8x32xbf16> to vector<8x32xbf16>
    %2 = vector.shape_cast %1 : vector<8x32xbf16> to vector<1x8x32xbf16>
    %3 = vector.shape_cast %2 : vector<1x8x32xbf16> to vector<1x8x32xbf16>
    %4 = vector.broadcast %3 : vector<1x8x32xbf16> to vector<12x8x32xbf16>
    %c0_2 = arith.constant 0 : index
    %c0_3 = arith.constant 0 : index
    %c0_4 = arith.constant 0 : index
    %5 = vector.load %arg2[%c0_2, %c0_3, %c0_4] : memref<12x32x8xbf16, #tpu.memory_space<vmem>>, vector<12x32x8xbf16>
    %cst = arith.constant dense<0.000000e+00> : vector<12x8x8xf32>
    %6 = tpu.matmul %4, %5, %cst {dimension_numbers = #tpu.dot_dimension_numbers<[2], [1], [1], [2], [0, 0, 0, 1, 1, 2], [0], [0]>} : vector<12x8x32xbf16>, vector<12x32x8xbf16>, vector<12x8x8xf32> -> vector<12x8x8xf32>
    %7 = vector.extract_strided_slice %6 {offsets = [0, 0, 0], sizes = [4, 8, 8], strides = [1, 1, 1]} : vector<12x8x8xf32> to vector<4x8x8xf32>
    %8 = arith.truncf %7 : vector<4x8x8xf32> to vector<4x8x8xbf16>
    %9 = vector.extract_strided_slice %6 {offsets = [4, 0, 0], sizes = [4, 8, 8], strides = [1, 1, 1]} : vector<12x8x8xf32> to vector<4x8x8xf32>
    %10 = arith.truncf %9 : vector<4x8x8xf32> to vector<4x8x8xbf16>
    %11 = vector.extract_strided_slice %6 {offsets = [8, 0, 0], sizes = [4, 8, 8], strides = [1, 1, 1]} : vector<12x8x8xf32> to vector<4x8x8xf32>
    %12 = arith.truncf %11 : vector<4x8x8xf32> to vector<4x8x8xbf16>
    "tpu.trace_start"() <{level = 10 : i32, message = "hqd,hkd->hqk"}> : () -> ()
    %cst_5 = arith.constant dense<0.000000e+00> : vector<4x8x8xf32>
    %13 = tpu.matmul %8, %10, %cst_5 {dimension_numbers = #tpu.dot_dimension_numbers<[2], [2], [1], [1], [0, 0, 0, 1, 1, 1], [0], [0]>} : vector<4x8x8xbf16>, vector<4x8x8xbf16>, vector<4x8x8xf32> -> vector<4x8x8xf32>
    "tpu.trace_stop"() : () -> ()
    %cst_6 = arith.constant 0.353553385 : f32
    %14 = vector.broadcast %cst_6 : f32 to vector<4x8x8xf32>
    %15 = arith.mulf %13, %14 : vector<4x8x8xf32>
    %16 = tpu.iota {dimensions = array<i32: 0>} : vector<8x8xi32>
    %17 = tpu.iota {dimensions = array<i32: 1>} : vector<8x8xi32>
    %18 = arith.cmpi sle, %17, %16 : vector<8x8xi32>
    %19 = vector.shape_cast %18 : vector<8x8xi1> to vector<1x8x8xi1>
    %20 = vector.shape_cast %19 : vector<1x8x8xi1> to vector<1x8x8xi1>
    %21 = vector.broadcast %20 : vector<1x8x8xi1> to vector<4x8x8xi1>
    %cst_7 = arith.constant -1.000000e+30 : f32
    %22 = vector.broadcast %cst_7 : f32 to vector<4x8x8xf32>
    %23 = arith.select %21, %15, %22 : vector<4x8x8xi1>, vector<4x8x8xf32>
    %cst_8 = arith.constant dense<0xFF800000> : vector<4x8xf32>
    %24 = vector.multi_reduction <maximumf>, %23, %cst_8 [2] : vector<4x8x8xf32> to vector<4x8xf32>
    %25 = vector.shape_cast %24 : vector<4x8xf32> to vector<4x8x1xf32>
    %26 = vector.broadcast %25 : vector<4x8x1xf32> to vector<4x8x8xf32>
    %27 = arith.subf %23, %26 : vector<4x8x8xf32>
    %28 = math.exp %27 : vector<4x8x8xf32>
    %cst_9 = arith.constant dense<0.000000e+00> : vector<4x8xf32>
    %29 = vector.multi_reduction <add>, %28, %cst_9 [2] : vector<4x8x8xf32> to vector<4x8xf32>
    %30 = vector.shape_cast %29 : vector<4x8xf32> to vector<4x8x1xf32>
    %31 = tpu.reciprocal %30 {approx = true} : vector<4x8x1xf32> -> vector<4x8x1xf32>
    %32 = vector.broadcast %31 : vector<4x8x1xf32> to vector<4x8x8xf32>
    %33 = arith.mulf %28, %32 : vector<4x8x8xf32>
    %34 = arith.truncf %33 : vector<4x8x8xf32> to vector<4x8x8xbf16>
    "tpu.trace_start"() <{level = 10 : i32, message = "hqk,hkd->hqd"}> : () -> ()
    %cst_10 = arith.constant dense<0.000000e+00> : vector<4x8x8xf32>
    %35 = tpu.matmul %34, %12, %cst_10 {dimension_numbers = #tpu.dot_dimension_numbers<[2], [1], [1], [2], [0, 0, 0, 1, 1, 2], [0], [0]>} : vector<4x8x8xbf16>, vector<4x8x8xbf16>, vector<4x8x8xf32> -> vector<4x8x8xf32>
    "tpu.trace_stop"() : () -> ()
    %36 = arith.truncf %35 : vector<4x8x8xf32> to vector<4x8x8xbf16>
    %c0_11 = arith.constant 0 : index
    %c0_12 = arith.constant 0 : index
    %c0_13 = arith.constant 0 : index
    %37 = vector.load %arg3[%c0_11, %c0_12, %c0_13] : memref<4x8x32xbf16, #tpu.memory_space<vmem>>, vector<4x8x32xbf16>
    %cst_14 = arith.constant dense<0.000000e+00> : vector<4x8x32xf32>
    %38 = tpu.matmul %36, %37, %cst_14 {dimension_numbers = #tpu.dot_dimension_numbers<[2], [1], [1], [2], [0, 0, 0, 1, 1, 2], [0], [0]>} : vector<4x8x8xbf16>, vector<4x8x32xbf16>, vector<4x8x32xf32> -> vector<4x8x32xf32>
    %cst_15 = arith.constant dense<0.000000e+00> : vector<8x32xf32>
    %39 = vector.multi_reduction <add>, %38, %cst_15 [0] : vector<4x8x32xf32> to vector<8x32xf32>
    %c0_16 = arith.constant 0 : index
    %c0_17 = arith.constant 0 : index
    %40 = vector.load %arg4[%c0_16, %c0_17] : memref<1x32xf32, #tpu.memory_space<vmem>>, vector<1x32xf32>
    %41 = vector.broadcast %40 : vector<1x32xf32> to vector<8x32xf32>
    %42 = arith.addf %39, %41 : vector<8x32xf32>
    %c0_18 = arith.constant 0 : index
    %c0_19 = arith.constant 0 : index
    %c0_20 = arith.constant 0 : index
    %43 = vector.load %arg5[%c0_18, %c0_19, %c0_20] : memref<1x8x32xf32, #tpu.memory_space<vmem>>, vector<1x8x32xf32>
    %44 = vector.shape_cast %43 : vector<1x8x32xf32> to vector<8x32xf32>
    %45 = vector.shape_cast %42 : vector<8x32xf32> to vector<1x8x32xf32>
    tpu.vector_store %arg5[%c0_18, %c0_19, %c0_20], %45 {strides = array<i32>} : memref<1x8x32xf32, #tpu.memory_space<vmem>>, vector<1x8x32xf32>,
    return
  }
  func.func @transform_0(%arg0: i32) -> (i32, i32, i32) {
    %c0_i32 = arith.constant 0 : i32
    %c0_i32_0 = arith.constant 0 : i32
    %c0_i32_1 = arith.constant 0 : i32
    return %arg0, %c0_i32, %c0_i32_0 : i32, i32, i32
  }
  func.func @transform_1(%arg0: i32) -> (i32, i32, i32) {
    %c0_i32 = arith.constant 0 : i32
    %c0_i32_0 = arith.constant 0 : i32
    %c0_i32_1 = arith.constant 0 : i32
    %c0_i32_2 = arith.constant 0 : i32
    return %c0_i32, %c0_i32_0, %c0_i32_1 : i32, i32, i32
  }
  func.func @transform_2(%arg0: i32) -> (i32, i32, i32) {
    %c0_i32 = arith.constant 0 : i32
    %c0_i32_0 = arith.constant 0 : i32
    %c0_i32_1 = arith.constant 0 : i32
    %c0_i32_2 = arith.constant 0 : i32
    return %c0_i32, %c0_i32_0, %c0_i32_1 : i32, i32, i32
  }
  func.func @transform_3(%arg0: i32) -> (i32, i32) {
    %c0_i32 = arith.constant 0 : i32
    %c0_i32_0 = arith.constant 0 : i32
    %c0_i32_1 = arith.constant 0 : i32
    return %c0_i32, %c0_i32_0 : i32, i32
  }
  func.func @transform_4(%arg0: i32) -> (i32, i32, i32) {
    %c0_i32 = arith.constant 0 : i32
    %c0_i32_0 = arith.constant 0 : i32
    %c0_i32_1 = arith.constant 0 : i32
    return %arg0, %c0_i32, %c0_i32_0 : i32, i32, i32
  }
}

</mosaic_0001>

<llo_original>
// kernel: mha_pallas.1
$region0: #{mha_pallas.1}
  #allocation0 [shape = 'u32[]', space=smem, size = 0x4, offset = 0x4, fixed_abs, tag = 'smem constant byte address 0x4 - core index']
  #allocation1 [shape = 'u32[144,128]{1,0:T(1,128)}', space=vmem, size = 0x12000, scoped, tag = 'internal scratch']
  %s0 = inlined_call_operand.vmem [shape: bf16[2,8,32], index: 0, kind: input, shape index: {}]
  %s1 = inlined_call_operand.vmem [shape: bf16[12,32,8], index: 1, kind: input, shape index: {}]
  %s2 = inlined_call_operand.vmem [shape: bf16[4,8,32], index: 2, kind: input, shape index: {}]
  %s3 = inlined_call_operand.vmem [shape: f32[1,32], index: 3, kind: input, shape index: {}]
  %s4 = inlined_call_operand.hbm [shape: f32[2,8,32], index: 4, kind: output, shape index: {}]
  %s5 = sld [smem:[#allocation0]]
  $region49: #{mha_pallas.1} parent=0
    _
  %s7 = ssub.s32 1, %s5
  %s8 = scalar_select 0, %s7, %s5
  $region1: #{mha_pallas.1} parent=0
    #allocation2 [shape = 'u8[8192]{0}', space=vmem, size = 0x2000, scoped, tag = 'output window, operand 0']
    #allocation3 [shape = 's32[2]{0}', space=sflag, size = 0x8, scoped, tag = 'scoped memory for mha_pallas.1']
    %9 = vsyncpa [#allocation3], 0
    %s10 = scalar_lea.sflag [#allocation3], 1
    %11 = vsyncpa %s10, 0
    loop: start=0, step=1, limit=4
    $region2: #{mha_pallas.1} parent=1 // loop_pre_header
      _
    $region3: #{mha_pallas.1} parent=1 // loop_header
      %s13 = sphi 0, %s17
      %p14 = scmp.ge.s32.totalorder %s13, 4
      %s23 = sphi 0, %s25
      %s26 = sphi 0, %s23
      %s27 = sphi 0, %s26
      %s43 = sphi 0, %s27
      %s47 = sphi 0, %s47
      %s49 = sphi 0, %s47
      %s50 = sphi 0, %s49
      %s64 = sphi 0, %s50
      %s68 = sphi 0, %s68
      %s70 = sphi 0, %s68
      %s71 = sphi 0, %s70
      %s85 = sphi 0, %s71
      %s89 = sphi 0, %s89
      %s91 = sphi 0, %s89
      %s92 = sphi 0, %s91
      %s106 = sphi 0, %s92
      %s112 = sphi 0, %s114
      %s115 = sphi 0, %s112
      %s116 = sphi 0, %s115
      %s132 = sphi 0, %s116
    $region4: #{mha_pallas.1} parent=1 // loop_header_branch
      %16 = sbr.rel (%p14) target = $region8
    $region5: #{mha_pallas.1} parent=1 // loop_body
      %s18 = ssub.s32 %s13, 1
      %s19 = ssub.s32 %s13, 2
      %s20 = sadd.s32 %s13, 1
      %s21 = ssub.s32 %s13, %s20
      %p22 = scmp.eq.s32.totalorder %s21, 0
      %s24 = sadd.s32 %s23, 1
      %s25 = scalar_select %p22, %s23, %s24
      %p28 = pneg %p22
      %p29 = scmp.eq.s32.totalorder %s13, 1
      %p30 = por %p28, %p29
      %p31 = scmp.ne.s32.totalorder %s23, %s26
      %p32 = scmp.eq.s32.totalorder %s13, 0
      %p33 = por %p31, %p32
      %p34 = scmp.ne.s32.totalorder %s23, %s26
      %p35 = scmp.eq.s32.totalorder %s18, 1
      %p36 = por %p34, %p35
      %p37 = scmp.ne.s32.totalorder %s26, %s27
      %p38 = scmp.eq.s32.totalorder %s18, 0
      %p39 = por %p37, %p38
      %p40 = scmp.ne.s32.totalorder %s26, %s27
      %p41 = scmp.eq.s32.totalorder %s19, 1
      %p42 = por %p40, %p41
      %p44 = scmp.ne.s32.totalorder %s27, %s43
      %p45 = scmp.eq.s32.totalorder %s19, 0
      %p46 = por %p44, %p45
      %s48 = sadd.s32 %s47, 1
      %p51 = scmp.eq.s32.totalorder %s13, 1
      %p52 = scmp.ne.s32.totalorder %s47, %s49
      %p53 = scmp.eq.s32.totalorder %s13, 0
      %p54 = por %p52, %p53
      %p55 = scmp.ne.s32.totalorder %s47, %s49
      %p56 = scmp.eq.s32.totalorder %s18, 1
      %p57 = por %p55, %p56
      %p58 = scmp.ne.s32.totalorder %s49, %s50
      %p59 = scmp.eq.s32.totalorder %s18, 0
      %p60 = por %p58, %p59
      %p61 = scmp.ne.s32.totalorder %s49, %s50
      %p62 = scmp.eq.s32.totalorder %s19, 1
      %p63 = por %p61, %p62
      %p65 = scmp.ne.s32.totalorder %s50, %s64
      %p66 = scmp.eq.s32.totalorder %s19, 0
      %p67 = por %p65, %p66
      %s69 = sadd.s32 %s68, 1
      %p72 = scmp.eq.s32.totalorder %s13, 1
      %p73 = scmp.ne.s32.totalorder %s68, %s70
      %p74 = scmp.eq.s32.totalorder %s13, 0
      %p75 = por %p73, %p74
      %p76 = scmp.ne.s32.totalorder %s68, %s70
      %p77 = scmp.eq.s32.totalorder %s18, 1
      %p78 = por %p76, %p77
      %p79 = scmp.ne.s32.totalorder %s70, %s71
      %p80 = scmp.eq.s32.totalorder %s18, 0
      %p81 = por %p79, %p80
      %p82 = scmp.ne.s32.totalorder %s70, %s71
      %p83 = scmp.eq.s32.totalorder %s19, 1
      %p84 = por %p82, %p83
      %p86 = scmp.ne.s32.totalorder %s71, %s85
      %p87 = scmp.eq.s32.totalorder %s19, 0
      %p88 = por %p86, %p87
      %s90 = sadd.s32 %s89, 1
      %p93 = scmp.eq.s32.totalorder %s13, 1
      %p94 = scmp.ne.s32.totalorder %s89, %s91
      %p95 = scmp.eq.s32.totalorder %s13, 0
      %p96 = por %p94, %p95
      %p97 = scmp.ne.s32.totalorder %s89, %s91
      %p98 = scmp.eq.s32.totalorder %s18, 1
      %p99 = por %p97, %p98
      %p100 = scmp.ne.s32.totalorder %s91, %s92
      %p101 = scmp.eq.s32.totalorder %s18, 0
      %p102 = por %p100, %p101
      %p103 = scmp.ne.s32.totalorder %s91, %s92
      %p104 = scmp.eq.s32.totalorder %s19, 1
      %p105 = por %p103, %p104
      %p107 = scmp.ne.s32.totalorder %s92, %s106
      %p108 = scmp.eq.s32.totalorder %s19, 0
      %p109 = por %p107, %p108
      %s110 = ssub.s32 %s13, %s20
      %p111 = scmp.eq.s32.totalorder %s110, 0
      %s113 = sadd.s32 %s112, 1
      %s114 = scalar_select %p111, %s112, %s113
      %p117 = pneg %p111
      %p118 = scmp.eq.s32.totalorder %s13, 1
      %p119 = por %p117, %p118
      %p120 = scmp.ne.s32.totalorder %s112, %s115
      %p121 = scmp.eq.s32.totalorder %s13, 0
      %p122 = por %p120, %p121
      %p123 = scmp.ne.s32.totalorder %s112, %s115
      %p124 = scmp.eq.s32.totalorder %s18, 1
      %p125 = por %p123, %p124
      %p126 = scmp.ne.s32.totalorder %s115, %s116
      %p127 = scmp.eq.s32.totalorder %s18, 0
      %p128 = por %p126, %p127
      %p129 = scmp.ne.s32.totalorder %s115, %s116
      %p130 = scmp.eq.s32.totalorder %s19, 1
      %p131 = por %p129, %p130
      %p133 = scmp.ne.s32.totalorder %s116, %s132
      %p134 = scmp.eq.s32.totalorder %s19, 0
      %p135 = por %p133, %p134
      %p136 = scmp.le.s32.totalorder 1, %s13
      %p137 = scmp.lt.s32.totalorder %s13, 3
      %p138 = pnand %p136, %p137
      %p139 = pneg %p138
      // Predicated region
      $region9: #{mha_pallas.1} parent=5 // pred_check
        _
      $region10: #{mha_pallas.1} parent=5 // pred_check_branch
        %141 = sbr.rel (%p138) target = $region12
      $region11: #{mha_pallas.1} parent=5 // pred_region
        %s142 = ssub.s32 %s13, 1
        // Predicated region
        $region13: #{mha_pallas.1} parent=11 // pred_check
          %p143 = pneg %p60
        $region14: #{mha_pallas.1} parent=11 // pred_check_branch
          %145 = sbr.rel (%p143) target = $region16
        $region15: #{mha_pallas.1} parent=11 // pred_region
          _
        $region16: #{mha_pallas.1} parent=11 // pred_fallthru
          _
        // Predicated region
        $region17: #{mha_pallas.1} parent=11 // pred_check
          %p146 = pneg %p81
        $region18: #{mha_pallas.1} parent=11 // pred_check_branch
          %148 = sbr.rel (%p146) target = $region20
        $region19: #{mha_pallas.1} parent=11 // pred_region
          _
        $region20: #{mha_pallas.1} parent=11 // pred_fallthru
          _
        // Predicated region
        $region21: #{mha_pallas.1} parent=11 // pred_check
          %p149 = pneg %p102
        $region22: #{mha_pallas.1} parent=11 // pred_check_branch
          %151 = sbr.rel (%p149) target = $region24
        $region23: #{mha_pallas.1} parent=11 // pred_region
          _
        $region24: #{mha_pallas.1} parent=11 // pred_fallthru
          _
      $region12: #{mha_pallas.1} parent=5 // pred_fallthru
        _
      %p152 = scmp.lt.s32.totalorder %s13, 2
      // Predicated region
      $region25: #{mha_pallas.1} parent=5 // pred_check
        %p153 = pneg %p152
      $region26: #{mha_pallas.1} parent=5 // pred_check_branch
        %155 = sbr.rel (%p153) target = $region28
      $region27: #{mha_pallas.1} parent=5 // pred_region
        // Predicated region
        $region29: #{mha_pallas.1} parent=27 // pred_check
          %p156 = pneg %p33
        $region30: #{mha_pallas.1} parent=27 // pred_check_branch
          %158 = sbr.rel (%p156) target = $region32
        $region31: #{mha_pallas.1} parent=27 // pred_region
          %p159 = scmp.lt.s32.totalorder %s13, 1
          %s160 = scalar_select %p159, %s13, 1
          %s161 = smul.addr %s160, 4
          %s162 = scalar_lea.vmem %s0, %s161
        $region32: #{mha_pallas.1} parent=27 // pred_fallthru
          _
      $region28: #{mha_pallas.1} parent=5 // pred_fallthru
        _
      %p163 = scmp.le.s32.totalorder 1, %s13
      %p164 = scmp.lt.s32.totalorder %s13, 3
      %p165 = pnand %p163, %p164
      %p166 = pneg %p165
      // Predicated region
      $region33: #{mha_pallas.1} parent=5 // pred_check
        _
      $region34: #{mha_pallas.1} parent=5 // pred_check_branch
        %168 = sbr.rel (%p165) target = $region36
      $region35: #{mha_pallas.1} parent=5 // pred_region
        %s169 = ssub.s32 %s13, 1
        %p170 = scmp.lt.s32.totalorder %s18, 1
        %s171 = scalar_select %p170, %s18, 1
        %s172 = smul.addr %s171, 4
        %s173 = scalar_lea.vmem %s0, %s172
        %p174 = pneg %p39
        %p175 = pneg %p36
        %p176 = pneg %p60
        %p177 = pneg %p57
        %p178 = pneg %p81
        %p179 = pneg %p78
        %p180 = pneg %p102
        %p181 = pneg %p99
        %p182 = pneg %p128
        %p183 = pneg %p125
        %s184 = sand.u32 %s115, 1
        %s185 = scalar_lea.sflag [#allocation3], %s184
        %s186 = sand.u32 %s115, 1
        %s187 = smul.addr %s186, 8
        %s188 = scalar_lea.vmem [#allocation2], %s187
        %p189 = scmp.lt.s32.totalorder %s18, 1
        %s190 = scalar_select %p189, %s18, 1
        %s191 = smul.addr %s190, 4
        %s192 = scalar_lea.vmem %s0, %s191
        %v194 = vld [vmem:[%s192] sm:$0xf]
        %v195 = vld [vmem:[%s1] sm:$0xf]
        %v196 = vld [vmem:[%s1 + $0x4] sm:$0xf]
        %v197 = vld [vmem:[%s1 + $0x8] sm:$0xf]
        %v198 = vld [vmem:[%s1 + $0xc] sm:$0xf]
        %v199 = vld [vmem:[%s1 + $0x10] sm:$0xf]
        %v200 = vld [vmem:[%s1 + $0x14] sm:$0xf]
        %v201 = vld [vmem:[%s1 + $0x18] sm:$0xf]
        %v202 = vld [vmem:[%s1 + $0x1c] sm:$0xf]
        %v203 = vld [vmem:[%s1 + $0x20] sm:$0xf]
        %v204 = vld [vmem:[%s1 + $0x24] sm:$0xf]
        %v205 = vld [vmem:[%s1 + $0x28] sm:$0xf]
        %v206 = vld [vmem:[%s1 + $0x2c] sm:$0xf]
        %v207 = vld [vmem:[%s1 + $0x30] sm:$0xf]
        %v208 = vld [vmem:[%s1 + $0x34] sm:$0xf]
        %v209 = vld [vmem:[%s1 + $0x38] sm:$0xf]
        %v210 = vld [vmem:[%s1 + $0x3c] sm:$0xf]
        %v211 = vld [vmem:[%s1 + $0x40] sm:$0xf]
        %v212 = vld [vmem:[%s1 + $0x44] sm:$0xf]
        %v213 = vld [vmem:[%s1 + $0x48] sm:$0xf]
        %v214 = vld [vmem:[%s1 + $0x4c] sm:$0xf]
        %v215 = vld [vmem:[%s1 + $0x50] sm:$0xf]
        %v216 = vld [vmem:[%s1 + $0x54] sm:$0xf]
        %v217 = vld [vmem:[%s1 + $0x58] sm:$0xf]
        %v218 = vld [vmem:[%s1 + $0x5c] sm:$0xf]
        %v219 = vld [vmem:[%s1 + $0x60] sm:$0xf]
        %v220 = vld [vmem:[%s1 + $0x64] sm:$0xf]
        %v221 = vld [vmem:[%s1 + $0x68] sm:$0xf]
        %v222 = vld [vmem:[%s1 + $0x6c] sm:$0xf]
        %v223 = vld [vmem:[%s1 + $0x70] sm:$0xf]
        %v224 = vld [vmem:[%s1 + $0x74] sm:$0xf]
        %v225 = vld [vmem:[%s1 + $0x78] sm:$0xf]
        %v226 = vld [vmem:[%s1 + $0x7c] sm:$0xf]
        %v227 = vld [vmem:[%s1 + $0x80] sm:$0xf]
        %v228 = vld [vmem:[%s1 + $0x84] sm:$0xf]
        %v229 = vld [vmem:[%s1 + $0x88] sm:$0xf]
        %v230 = vld [vmem:[%s1 + $0x8c] sm:$0xf]
        %v231 = vld [vmem:[%s1 + $0x90] sm:$0xf]
        %v232 = vld [vmem:[%s1 + $0x94] sm:$0xf]
        %v233 = vld [vmem:[%s1 + $0x98] sm:$0xf]
        %v234 = vld [vmem:[%s1 + $0x9c] sm:$0xf]
        %v235 = vld [vmem:[%s1 + $0xa0] sm:$0xf]
        %v236 = vld [vmem:[%s1 + $0xa4] sm:$0xf]
        %v237 = vld [vmem:[%s1 + $0xa8] sm:$0xf]
        %v238 = vld [vmem:[%s1 + $0xac] sm:$0xf]
        %v239 = vld [vmem:[%s1 + $0xb0] sm:$0xf]
        %v240 = vld [vmem:[%s1 + $0xb4] sm:$0xf]
        %v241 = vld [vmem:[%s1 + $0xb8] sm:$0xf]
        %v242 = vld [vmem:[%s1 + $0xbc] sm:$0xf]
        %v247 = vunpack.c.l.b16 %v195
        %v248 = vunpack.c.l.b16 %v196
        %v249 = vunpack.c.l.b16 %v197
        %v250 = vunpack.c.l.b16 %v198
        %v251 = vpack.c.b16 %v248, %v247
        %v252 = vpack.c.b16 %v250, %v249
        %vm255 = vcmask 261120
        %v257 = vsel %vm255, %v194, 0
        %259 = vmatprep.subr.bf16.mxu0 0
        %260 = vmatpush1.bf16.msra.mxu0 %v251
        %261 = vmatprep.subr.bf16.mxu0 0
        %262 = vmatpush1.bf16.msra.mxu0 %v252
        %263 = vmatprep.subr.bf16.mxu0 0
        %264 = vmatpush1.bf16.msra.mxu0 0
        %265 = vmatprep.subr.bf16.mxu0 0
        %266 = vmatpush1.bf16.msra.mxu0 0
        %267 = vmatprep.subr.bf16.mxu0 0
        %268 = vmatpush1.bf16.msra.mxu0 0
        %269 = vmatprep.subr.bf16.mxu0 0
        %270 = vmatpush1.bf16.msra.mxu0 0
        %271 = vmatprep.subr.bf16.mxu0 0
        %272 = vmatpush1.bf16.msra.mxu0 0
        %273 = vmatprep.subr.bf16.mxu0 0
        %274 = vmatpush1.bf16.msra.mxu0 0
        %275 = vmatprep.subr.bf16.mxu0 0
        %276 = vmatpush1.bf16.msra.mxu0 0
        %277 = vmatprep.subr.bf16.mxu0 0
        %278 = vmatpush1.bf16.msra.mxu0 0
        %279 = vmatprep.subr.bf16.mxu0 0
        %280 = vmatpush1.bf16.msra.mxu0 0
        %281 = vmatprep.subr.bf16.mxu0 0
        %282 = vmatpush1.bf16.msra.mxu0 0
        %283 = vmatprep.subr.bf16.mxu0 0
        %284 = vmatpush1.bf16.msra.mxu0 0
        %285 = vmatprep.subr.bf16.mxu0 0
        %286 = vmatpush1.bf16.msra.mxu0 0
        %287 = vmatprep.subr.bf16.mxu0 0
        %288 = vmatpush1.bf16.msra.mxu0 0
        %289 = vmatprep.subr.bf16.mxu0 0
        %290 = vmatpush1.bf16.msra.mxu0 0
        %291 = vmatprep.mubr.bf16.mxu0 0
        %292 = vmatmul.mubr.bf16.gmra.mrb[0].mxu0 %v257
        %v293 = vpop.f32.mrb[0].mxu0
        %v294 = vadd.f32 0.0, %v293
        %v295 = vpop.f32.mrb[0].mxu0
        %v296 = vpop.f32.mrb[0].mxu0
        %v297 = vpop.f32.mrb[0].mxu0
        %298 = vdwg.mxu0
        %v303 = vunpack.c.l.b16 %v199
        %v304 = vunpack.c.l.b16 %v200
        %v305 = vunpack.c.l.b16 %v201
        %v306 = vunpack.c.l.b16 %v202
        %v307 = vpack.c.b16 %v304, %v303
        %v308 = vpack.c.b16 %v306, %v305
        %311 = vmatprep.subr.bf16.mxu0 0
        %312 = vmatpush1.bf16.msra.mxu0 %v307
        %313 = vmatprep.subr.bf16.mxu0 0
        %314 = vmatpush1.bf16.msra.mxu0 %v308
        %315 = vmatprep.subr.bf16.mxu0 0
        %316 = vmatpush1.bf16.msra.mxu0 0
        %317 = vmatprep.subr.bf16.mxu0 0
        %318 = vmatpush1.bf16.msra.mxu0 0
        %319 = vmatprep.subr.bf16.mxu0 0
        %320 = vmatpush1.bf16.msra.mxu0 0
        %321 = vmatprep.subr.bf16.mxu0 0
        %322 = vmatpush1.bf16.msra.mxu0 0
        %323 = vmatprep.subr.bf16.mxu0 0
        %324 = vmatpush1.bf16.msra.mxu0 0
        %325 = vmatprep.subr.bf16.mxu0 0
        %326 = vmatpush1.bf16.msra.mxu0 0
        %327 = vmatprep.subr.bf16.mxu0 0
        %328 = vmatpush1.bf16.msra.mxu0 0
        %329 = vmatprep.subr.bf16.mxu0 0
        %330 = vmatpush1.bf16.msra.mxu0 0
        %331 = vmatprep.subr.bf16.mxu0 0
        %332 = vmatpush1.bf16.msra.mxu0 0
        %333 = vmatprep.subr.bf16.mxu0 0
        %334 = vmatpush1.bf16.msra.mxu0 0
        %335 = vmatprep.subr.bf16.mxu0 0
        %336 = vmatpush1.bf16.msra.mxu0 0
        %337 = vmatprep.subr.bf16.mxu0 0
        %338 = vmatpush1.bf16.msra.mxu0 0
        %339 = vmatprep.subr.bf16.mxu0 0
        %340 = vmatpush1.bf16.msra.mxu0 0
        %341 = vmatprep.subr.bf16.mxu0 0
        %342 = vmatpush1.bf16.msra.mxu0 0
        %343 = vmatprep.mubr.bf16.mxu0 0
        %344 = vmatmul.mubr.bf16.gmra.mrb[0].mxu0 %v257
        %v345 = vpop.f32.mrb[0].mxu0
        %v346 = vadd.f32 0.0, %v345
        %v347 = vpop.f32.mrb[0].mxu0
        %v348 = vpop.f32.mrb[0].mxu0
        %v349 = vpop.f32.mrb[0].mxu0
        %350 = vdwg.mxu0
        %v355 = vunpack.c.l.b16 %v203
        %v356 = vunpack.c.l.b16 %v204
        %v357 = vunpack.c.l.b16 %v205
        %v358 = vunpack.c.l.b16 %v206
        %v359 = vpack.c.b16 %v356, %v355
        %v360 = vpack.c.b16 %v358, %v357
        %363 = vmatprep.subr.bf16.mxu0 0
        %364 = vmatpush1.bf16.msra.mxu0 %v359
        %365 = vmatprep.subr.bf16.mxu0 0
        %366 = vmatpush1.bf16.msra.mxu0 %v360
        %367 = vmatprep.subr.bf16.mxu0 0
        %368 = vmatpush1.bf16.msra.mxu0 0
        %369 = vmatprep.subr.bf16.mxu0 0
        %370 = vmatpush1.bf16.msra.mxu0 0
        %371 = vmatprep.subr.bf16.mxu0 0
        %372 = vmatpush1.bf16.msra.mxu0 0
        %373 = vmatprep.subr.bf16.mxu0 0
        %374 = vmatpush1.bf16.msra.mxu0 0
        %375 = vmatprep.subr.bf16.mxu0 0
        %376 = vmatpush1.bf16.msra.mxu0 0
        %377 = vmatprep.subr.bf16.mxu0 0
        %378 = vmatpush1.bf16.msra.mxu0 0
        %379 = vmatprep.subr.bf16.mxu0 0
        %380 = vmatpush1.bf16.msra.mxu0 0
        %381 = vmatprep.subr.bf16.mxu0 0
        %382 = vmatpush1.bf16.msra.mxu0 0
        %383 = vmatprep.subr.bf16.mxu0 0
        %384 = vmatpush1.bf16.msra.mxu0 0
        %385 = vmatprep.subr.bf16.mxu0 0
        %386 = vmatpush1.bf16.msra.mxu0 0
        %387 = vmatprep.subr.bf16.mxu0 0
        %388 = vmatpush1.bf16.msra.mxu0 0
        %389 = vmatprep.subr.bf16.mxu0 0
        %390 = vmatpush1.bf16.msra.mxu0 0
        %391 = vmatprep.subr.bf16.mxu0 0
        %392 = vmatpush1.bf16.msra.mxu0 0
        %393 = vmatprep.subr.bf16.mxu0 0
        %394 = vmatpush1.bf16.msra.mxu0 0
        %395 = vmatprep.mubr.bf16.mxu0 0
        %396 = vmatmul.mubr.bf16.gmra.mrb[0].mxu0 %v257
        %v397 = vpop.f32.mrb[0].mxu0
        %v398 = vadd.f32 0.0, %v397
        %v399 = vpop.f32.mrb[0].mxu0
        %v400 = vpop.f32.mrb[0].mxu0
        %v401 = vpop.f32.mrb[0].mxu0
        %402 = vdwg.mxu0
        %v407 = vunpack.c.l.b16 %v207
        %v408 = vunpack.c.l.b16 %v208
        %v409 = vunpack.c.l.b16 %v209
        %v410 = vunpack.c.l.b16 %v210
        %v411 = vpack.c.b16 %v408, %v407
        %v412 = vpack.c.b16 %v410, %v409
        %415 = vmatprep.subr.bf16.mxu0 0
        %416 = vmatpush1.bf16.msra.mxu0 %v411
        %417 = vmatprep.subr.bf16.mxu0 0
        %418 = vmatpush1.bf16.msra.mxu0 %v412
        %419 = vmatprep.subr.bf16.mxu0 0
        %420 = vmatpush1.bf16.msra.mxu0 0
        %421 = vmatprep.subr.bf16.mxu0 0
        %422 = vmatpush1.bf16.msra.mxu0 0
        %423 = vmatprep.subr.bf16.mxu0 0
        %424 = vmatpush1.bf16.msra.mxu0 0
        %425 = vmatprep.subr.bf16.mxu0 0
        %426 = vmatpush1.bf16.msra.mxu0 0
        %427 = vmatprep.subr.bf16.mxu0 0
        %428 = vmatpush1.bf16.msra.mxu0 0
        %429 = vmatprep.subr.bf16.mxu0 0
        %430 = vmatpush1.bf16.msra.mxu0 0
        %431 = vmatprep.subr.bf16.mxu0 0
        %432 = vmatpush1.bf16.msra.mxu0 0
        %433 = vmatprep.subr.bf16.mxu0 0
        %434 = vmatpush1.bf16.msra.mxu0 0
        %435 = vmatprep.subr.bf16.mxu0 0
        %436 = vmatpush1.bf16.msra.mxu0 0
        %437 = vmatprep.subr.bf16.mxu0 0
        %438 = vmatpush1.bf16.msra.mxu0 0
        %439 = vmatprep.subr.bf16.mxu0 0
        %440 = vmatpush1.bf16.msra.mxu0 0
        %441 = vmatprep.subr.bf16.mxu0 0
        %442 = vmatpush1.bf16.msra.mxu0 0
        %443 = vmatprep.subr.bf16.mxu0 0
        %444 = vmatpush1.bf16.msra.mxu0 0
        %445 = vmatprep.subr.bf16.mxu0 0
        %446 = vmatpush1.bf16.msra.mxu0 0
        %447 = vmatprep.mubr.bf16.mxu0 0
        %448 = vmatmul.mubr.bf16.gmra.mrb[0].mxu0 %v257
        %v449 = vpop.f32.mrb[0].mxu0
        %v450 = vadd.f32 0.0, %v449
        %v451 = vpop.f32.mrb[0].mxu0
        %v452 = vpop.f32.mrb[0].mxu0
        %v453 = vpop.f32.mrb[0].mxu0
        %454 = vdwg.mxu0
        %v459 = vunpack.c.l.b16 %v211
        %v460 = vunpack.c.l.b16 %v212
        %v461 = vunpack.c.l.b16 %v213
        %v462 = vunpack.c.l.b16 %v214
        %v463 = vpack.c.b16 %v460, %v459
        %v464 = vpack.c.b16 %v462, %v461
        %467 = vmatprep.subr.bf16.mxu0 0
        %468 = vmatpush1.bf16.msra.mxu0 %v463
        %469 = vmatprep.subr.bf16.mxu0 0
        %470 = vmatpush1.bf16.msra.mxu0 %v464
        %471 = vmatprep.subr.bf16.mxu0 0
        %472 = vmatpush1.bf16.msra.mxu0 0
        %473 = vmatprep.subr.bf16.mxu0 0
        %474 = vmatpush1.bf16.msra.mxu0 0
        %475 = vmatprep.subr.bf16.mxu0 0
        %476 = vmatpush1.bf16.msra.mxu0 0
        %477 = vmatprep.subr.bf16.mxu0 0
        %478 = vmatpush1.bf16.msra.mxu0 0
        %479 = vmatprep.subr.bf16.mxu0 0
        %480 = vmatpush1.bf16.msra.mxu0 0
        %481 = vmatprep.subr.bf16.mxu0 0
        %482 = vmatpush1.bf16.msra.mxu0 0
        %483 = vmatprep.subr.bf16.mxu0 0
        %484 = vmatpush1.bf16.msra.mxu0 0
        %485 = vmatprep.subr.bf16.mxu0 0
        %486 = vmatpush1.bf16.msra.mxu0 0
        %487 = vmatprep.subr.bf16.mxu0 0
        %488 = vmatpush1.bf16.msra.mxu0 0
        %489 = vmatprep.subr.bf16.mxu0 0
        %490 = vmatpush1.bf16.msra.mxu0 0
        %491 = vmatprep.subr.bf16.mxu0 0
        %492 = vmatpush1.bf16.msra.mxu0 0
        %493 = vmatprep.subr.bf16.mxu0 0
        %494 = vmatpush1.bf16.msra.mxu0 0
        %495 = vmatprep.subr.bf16.mxu0 0
        %496 = vmatpush1.bf16.msra.mxu0 0
        %497 = vmatprep.subr.bf16.mxu0 0
        %498 = vmatpush1.bf16.msra.mxu0 0
        %499 = vmatprep.mubr.bf16.mxu0 0
        %500 = vmatmul.mubr.bf16.gmra.mrb[0].mxu0 %v257
        %v501 = vpop.f32.mrb[0].mxu0
        %v502 = vadd.f32 0.0, %v501
        %v503 = vpop.f32.mrb[0].mxu0
        %v504 = vpop.f32.mrb[0].mxu0
        %v505 = vpop.f32.mrb[0].mxu0
        %506 = vdwg.mxu0
        %v511 = vunpack.c.l.b16 %v215
        %v512 = vunpack.c.l.b16 %v216
        %v513 = vunpack.c.l.b16 %v217
        %v514 = vunpack.c.l.b16 %v218
        %v515 = vpack.c.b16 %v512, %v511
        %v516 = vpack.c.b16 %v514, %v513
        %519 = vmatprep.subr.bf16.mxu0 0
        %520 = vmatpush1.bf16.msra.mxu0 %v515
        %521 = vmatprep.subr.bf16.mxu0 0
        %522 = vmatpush1.bf16.msra.mxu0 %v516
        %523 = vmatprep.subr.bf16.mxu0 0
        %524 = vmatpush1.bf16.msra.mxu0 0
        %525 = vmatprep.subr.bf16.mxu0 0
        %526 = vmatpush1.bf16.msra.mxu0 0
        %527 = vmatprep.subr.bf16.mxu0 0
        %528 = vmatpush1.bf16.msra.mxu0 0
        %529 = vmatprep.subr.bf16.mxu0 0
        %530 = vmatpush1.bf16.msra.mxu0 0
        %531 = vmatprep.subr.bf16.mxu0 0
        %532 = vmatpush1.bf16.msra.mxu0 0
        %533 = vmatprep.subr.bf16.mxu0 0
        %534 = vmatpush1.bf16.msra.mxu0 0
        %535 = vmatprep.subr.bf16.mxu0 0
        %536 = vmatpush1.bf16.msra.mxu0 0
        %537 = vmatprep.subr.bf16.mxu0 0
        %538 = vmatpush1.bf16.msra.mxu0 0
        %539 = vmatprep.subr.bf16.mxu0 0
        %540 = vmatpush1.bf16.msra.mxu0 0
        %541 = vmatprep.subr.bf16.mxu0 0
        %542 = vmatpush1.bf16.msra.mxu0 0
        %543 = vmatprep.subr.bf16.mxu0 0
        %544 = vmatpush1.bf16.msra.mxu0 0
        %545 = vmatprep.subr.bf16.mxu0 0
        %546 = vmatpush1.bf16.msra.mxu0 0
        %547 = vmatprep.subr.bf16.mxu0 0
        %548 = vmatpush1.bf16.msra.mxu0 0
        %549 = vmatprep.subr.bf16.mxu0 0
        %550 = vmatpush1.bf16.msra.mxu0 0
        %551 = vmatprep.mubr.bf16.mxu0 0
        %552 = vmatmul.mubr.bf16.gmra.mrb[0].mxu0 %v257
        %v553 = vpop.f32.mrb[0].mxu0
        %v554 = vadd.f32 0.0, %v553
        %v555 = vpop.f32.mrb[0].mxu0
        %v556 = vpop.f32.mrb[0].mxu0
        %v557 = vpop.f32.mrb[0].mxu0
        %558 = vdwg.mxu0
        %v563 = vunpack.c.l.b16 %v219
        %v564 = vunpack.c.l.b16 %v220
        %v565 = vunpack.c.l.b16 %v221
        %v566 = vunpack.c.l.b16 %v222
        %v567 = vpack.c.b16 %v564, %v563
        %v568 = vpack.c.b16 %v566, %v565
        %571 = vmatprep.subr.bf16.mxu0 0
        %572 = vmatpush1.bf16.msra.mxu0 %v567
        %573 = vmatprep.subr.bf16.mxu0 0
        %574 = vmatpush1.bf16.msra.mxu0 %v568
        %575 = vmatprep.subr.bf16.mxu0 0
        %576 = vmatpush1.bf16.msra.mxu0 0
        %577 = vmatprep.subr.bf16.mxu0 0
        %578 = vmatpush1.bf16.msra.mxu0 0
        %579 = vmatprep.subr.bf16.mxu0 0
        %580 = vmatpush1.bf16.msra.mxu0 0
        %581 = vmatprep.subr.bf16.mxu0 0
        %582 = vmatpush1.bf16.msra.mxu0 0
        %583 = vmatprep.subr.bf16.mxu0 0
        %584 = vmatpush1.bf16.msra.mxu0 0
        %585 = vmatprep.subr.bf16.mxu0 0
        %586 = vmatpush1.bf16.msra.mxu0 0
        %587 = vmatprep.subr.bf16.mxu0 0
        %588 = vmatpush1.bf16.msra.mxu0 0
        %589 = vmatprep.subr.bf16.mxu0 0
        %590 = vmatpush1.bf16.msra.mxu0 0
        %591 = vmatprep.subr.bf16.mxu0 0
        %592 = vmatpush1.bf16.msra.mxu0 0
        %593 = vmatprep.subr.bf16.mxu0 0
        %594 = vmatpush1.bf16.msra.mxu0 0
        %595 = vmatprep.subr.bf16.mxu0 0
        %596 = vmatpush1.bf16.msra.mxu0 0
        %597 = vmatprep.subr.bf16.mxu0 0
        %598 = vmatpush1.bf16.msra.mxu0 0
        %599 = vmatprep.subr.bf16.mxu0 0
        %600 = vmatpush1.bf16.msra.mxu0 0
        %601 = vmatprep.subr.bf16.mxu0 0
        %602 = vmatpush1.bf16.msra.mxu0 0
        %603 = vmatprep.mubr.bf16.mxu0 0
        %604 = vmatmul.mubr.bf16.gmra.mrb[0].mxu0 %v257
        %v605 = vpop.f32.mrb[0].mxu0
        %v606 = vadd.f32 0.0, %v605
        %v607 = vpop.f32.mrb[0].mxu0
        %v608 = vpop.f32.mrb[0].mxu0
        %v609 = vpop.f32.mrb[0].mxu0
        %610 = vdwg.mxu0
        %v615 = vunpack.c.l.b16 %v223
        %v616 = vunpack.c.l.b16 %v224
        %v617 = vunpack.c.l.b16 %v225
        %v618 = vunpack.c.l.b16 %v226
        %v619 = vpack.c.b16 %v616, %v615
        %v620 = vpack.c.b16 %v618, %v617
        %623 = vmatprep.subr.bf16.mxu0 0
        %624 = vmatpush1.bf16.msra.mxu0 %v619
        %625 = vmatprep.subr.bf16.mxu0 0
        %626 = vmatpush1.bf16.msra.mxu0 %v620
        %627 = vmatprep.subr.bf16.mxu0 0
        %628 = vmatpush1.bf16.msra.mxu0 0
        %629 = vmatprep.subr.bf16.mxu0 0
        %630 = vmatpush1.bf16.msra.mxu0 0
        %631 = vmatprep.subr.bf16.mxu0 0
        %632 = vmatpush1.bf16.msra.mxu0 0
        %633 = vmatprep.subr.bf16.mxu0 0
        %634 = vmatpush1.bf16.msra.mxu0 0
        %635 = vmatprep.subr.bf16.mxu0 0
        %636 = vmatpush1.bf16.msra.mxu0 0
        %637 = vmatprep.subr.bf16.mxu0 0
        %638 = vmatpush1.bf16.msra.mxu0 0
        %639 = vmatprep.subr.bf16.mxu0 0
        %640 = vmatpush1.bf16.msra.mxu0 0
        %641 = vmatprep.subr.bf16.mxu0 0
        %642 = vmatpush1.bf16.msra.mxu0 0
        %643 = vmatprep.subr.bf16.mxu0 0
        %644 = vmatpush1.bf16.msra.mxu0 0
        %645 = vmatprep.subr.bf16.mxu0 0
        %646 = vmatpush1.bf16.msra.mxu0 0
        %647 = vmatprep.subr.bf16.mxu0 0
        %648 = vmatpush1.bf16.msra.mxu0 0
        %649 = vmatprep.subr.bf16.mxu0 0
        %650 = vmatpush1.bf16.msra.mxu0 0
        %651 = vmatprep.subr.bf16.mxu0 0
        %652 = vmatpush1.bf16.msra.mxu0 0
        %653 = vmatprep.subr.bf16.mxu0 0
        %654 = vmatpush1.bf16.msra.mxu0 0
        %655 = vmatprep.mubr.bf16.mxu0 0
        %656 = vmatmul.mubr.bf16.gmra.mrb[0].mxu0 %v257
        %v657 = vpop.f32.mrb[0].mxu0
        %v658 = vadd.f32 0.0, %v657
        %v659 = vpop.f32.mrb[0].mxu0
        %v660 = vpop.f32.mrb[0].mxu0
        %v661 = vpop.f32.mrb[0].mxu0
        %662 = vdwg.mxu0
        %v667 = vunpack.c.l.b16 %v227
        %v668 = vunpack.c.l.b16 %v228
        %v669 = vunpack.c.l.b16 %v229
        %v670 = vunpack.c.l.b16 %v230
        %v671 = vpack.c.b16 %v668, %v667
        %v672 = vpack.c.b16 %v670, %v669
        %675 = vmatprep.subr.bf16.mxu0 0
        %676 = vmatpush1.bf16.msra.mxu0 %v671
        %677 = vmatprep.subr.bf16.mxu0 0
        %678 = vmatpush1.bf16.msra.mxu0 %v672
        %679 = vmatprep.subr.bf16.mxu0 0
        %680 = vmatpush1.bf16.msra.mxu0 0
        %681 = vmatprep.subr.bf16.mxu0 0
        %682 = vmatpush1.bf16.msra.mxu0 0
        %683 = vmatprep.subr.bf16.mxu0 0
        %684 = vmatpush1.bf16.msra.mxu0 0
        %685 = vmatprep.subr.bf16.mxu0 0
        %686 = vmatpush1.bf16.msra.mxu0 0
        %687 = vmatprep.subr.bf16.mxu0 0
        %688 = vmatpush1.bf16.msra.mxu0 0
        %689 = vmatprep.subr.bf16.mxu0 0
        %690 = vmatpush1.bf16.msra.mxu0 0
        %691 = vmatprep.subr.bf16.mxu0 0
        %692 = vmatpush1.bf16.msra.mxu0 0
        %693 = vmatprep.subr.bf16.mxu0 0
        %694 = vmatpush1.bf16.msra.mxu0 0
        %695 = vmatprep.subr.bf16.mxu0 0
        %696 = vmatpush1.bf16.msra.mxu0 0
        %697 = vmatprep.subr.bf16.mxu0 0
        %698 = vmatpush1.bf16.msra.mxu0 0
        %699 = vmatprep.subr.bf16.mxu0 0
        %700 = vmatpush1.bf16.msra.mxu0 0
        %701 = vmatprep.subr.bf16.mxu0 0
        %702 = vmatpush1.bf16.msra.mxu0 0
        %703 = vmatprep.subr.bf16.mxu0 0
        %704 = vmatpush1.bf16.msra.mxu0 0
        %705 = vmatprep.subr.bf16.mxu0 0
        %706 = vmatpush1.bf16.msra.mxu0 0
        %707 = vmatprep.mubr.bf16.mxu0 0
        %708 = vmatmul.mubr.bf16.gmra.mrb[0].mxu0 %v257
        %v709 = vpop.f32.mrb[0].mxu0
        %v710 = vadd.f32 0.0, %v709
        %v711 = vpop.f32.mrb[0].mxu0
        %v712 = vpop.f32.mrb[0].mxu0
        %v713 = vpop.f32.mrb[0].mxu0
        %714 = vdwg.mxu0
        %v719 = vunpack.c.l.b16 %v231
        %v720 = vunpack.c.l.b16 %v232
        %v721 = vunpack.c.l.b16 %v233
        %v722 = vunpack.c.l.b16 %v234
        %v723 = vpack.c.b16 %v720, %v719
        %v724 = vpack.c.b16 %v722, %v721
        %727 = vmatprep.subr.bf16.mxu0 0
        %728 = vmatpush1.bf16.msra.mxu0 %v723
        %729 = vmatprep.subr.bf16.mxu0 0
        %730 = vmatpush1.bf16.msra.mxu0 %v724
        %731 = vmatprep.subr.bf16.mxu0 0
        %732 = vmatpush1.bf16.msra.mxu0 0
        %733 = vmatprep.subr.bf16.mxu0 0
        %734 = vmatpush1.bf16.msra.mxu0 0
        %735 = vmatprep.subr.bf16.mxu0 0
        %736 = vmatpush1.bf16.msra.mxu0 0
        %737 = vmatprep.subr.bf16.mxu0 0
        %738 = vmatpush1.bf16.msra.mxu0 0
        %739 = vmatprep.subr.bf16.mxu0 0
        %740 = vmatpush1.bf16.msra.mxu0 0
        %741 = vmatprep.subr.bf16.mxu0 0
        %742 = vmatpush1.bf16.msra.mxu0 0
        %743 = vmatprep.subr.bf16.mxu0 0
        %744 = vmatpush1.bf16.msra.mxu0 0
        %745 = vmatprep.subr.bf16.mxu0 0
        %746 = vmatpush1.bf16.msra.mxu0 0
        %747 = vmatprep.subr.bf16.mxu0 0
        %748 = vmatpush1.bf16.msra.mxu0 0
        %749 = vmatprep.subr.bf16.mxu0 0
        %750 = vmatpush1.bf16.msra.mxu0 0
        %751 = vmatprep.subr.bf16.mxu0 0
        %752 = vmatpush1.bf16.msra.mxu0 0
        %753 = vmatprep.subr.bf16.mxu0 0
        %754 = vmatpush1.bf16.msra.mxu0 0
        %755 = vmatprep.subr.bf16.mxu0 0
        %756 = vmatpush1.bf16.msra.mxu0 0
        %757 = vmatprep.subr.bf16.mxu0 0
        %758 = vmatpush1.bf16.msra.mxu0 0
        %759 = vmatprep.mubr.bf16.mxu0 0
        %760 = vmatmul.mubr.bf16.gmra.mrb[0].mxu0 %v257
        %v761 = vpop.f32.mrb[0].mxu0
        %v762 = vadd.f32 0.0, %v761
        %v763 = vpop.f32.mrb[0].mxu0
        %v764 = vpop.f32.mrb[0].mxu0
        %v765 = vpop.f32.mrb[0].mxu0
        %766 = vdwg.mxu0
        %v771 = vunpack.c.l.b16 %v235
        %v772 = vunpack.c.l.b16 %v236
        %v773 = vunpack.c.l.b16 %v237
        %v774 = vunpack.c.l.b16 %v238
        %v775 = vpack.c.b16 %v772, %v771
        %v776 = vpack.c.b16 %v774, %v773
        %779 = vmatprep.subr.bf16.mxu0 0
        %780 = vmatpush1.bf16.msra.mxu0 %v775
        %781 = vmatprep.subr.bf16.mxu0 0
        %782 = vmatpush1.bf16.msra.mxu0 %v776
        %783 = vmatprep.subr.bf16.mxu0 0
        %784 = vmatpush1.bf16.msra.mxu0 0
        %785 = vmatprep.subr.bf16.mxu0 0
        %786 = vmatpush1.bf16.msra.mxu0 0
        %787 = vmatprep.subr.bf16.mxu0 0
        %788 = vmatpush1.bf16.msra.mxu0 0
        %789 = vmatprep.subr.bf16.mxu0 0
        %790 = vmatpush1.bf16.msra.mxu0 0
        %791 = vmatprep.subr.bf16.mxu0 0
        %792 = vmatpush1.bf16.msra.mxu0 0
        %793 = vmatprep.subr.bf16.mxu0 0
        %794 = vmatpush1.bf16.msra.mxu0 0
        %795 = vmatprep.subr.bf16.mxu0 0
        %796 = vmatpush1.bf16.msra.mxu0 0
        %797 = vmatprep.subr.bf16.mxu0 0
        %798 = vmatpush1.bf16.msra.mxu0 0
        %799 = vmatprep.subr.bf16.mxu0 0
        %800 = vmatpush1.bf16.msra.mxu0 0
        %801 = vmatprep.subr.bf16.mxu0 0
        %802 = vmatpush1.bf16.msra.mxu0 0
        %803 = vmatprep.subr.bf16.mxu0 0
        %804 = vmatpush1.bf16.msra.mxu0 0
        %805 = vmatprep.subr.bf16.mxu0 0
        %806 = vmatpush1.bf16.msra.mxu0 0
        %807 = vmatprep.subr.bf16.mxu0 0
        %808 = vmatpush1.bf16.msra.mxu0 0
        %809 = vmatprep.subr.bf16.mxu0 0
        %810 = vmatpush1.bf16.msra.mxu0 0
        %811 = vmatprep.mubr.bf16.mxu0 0
        %812 = vmatmul.mubr.bf16.gmra.mrb[0].mxu0 %v257
        %v813 = vpop.f32.mrb[0].mxu0
        %v814 = vadd.f32 0.0, %v813
        %v815 = vpop.f32.mrb[0].mxu0
        %v816 = vpop.f32.mrb[0].mxu0
        %v817 = vpop.f32.mrb[0].mxu0
        %818 = vdwg.mxu0
        %v823 = vunpack.c.l.b16 %v239
        %v824 = vunpack.c.l.b16 %v240
        %v825 = vunpack.c.l.b16 %v241
        %v826 = vunpack.c.l.b16 %v242
        %v827 = vpack.c.b16 %v824, %v823
        %v828 = vpack.c.b16 %v826, %v825
        %831 = vmatprep.subr.bf16.mxu0 0
        %832 = vmatpush1.bf16.msra.mxu0 %v827
        %833 = vmatprep.subr.bf16.mxu0 0
        %834 = vmatpush1.bf16.msra.mxu0 %v828
        %835 = vmatprep.subr.bf16.mxu0 0
        %836 = vmatpush1.bf16.msra.mxu0 0
        %837 = vmatprep.subr.bf16.mxu0 0
        %838 = vmatpush1.bf16.msra.mxu0 0
        %839 = vmatprep.subr.bf16.mxu0 0
        %840 = vmatpush1.bf16.msra.mxu0 0
        %841 = vmatprep.subr.bf16.mxu0 0
        %842 = vmatpush1.bf16.msra.mxu0 0
        %843 = vmatprep.subr.bf16.mxu0 0
        %844 = vmatpush1.bf16.msra.mxu0 0
        %845 = vmatprep.subr.bf16.mxu0 0
        %846 = vmatpush1.bf16.msra.mxu0 0
        %847 = vmatprep.subr.bf16.mxu0 0
        %848 = vmatpush1.bf16.msra.mxu0 0
        %849 = vmatprep.subr.bf16.mxu0 0
        %850 = vmatpush1.bf16.msra.mxu0 0
        %851 = vmatprep.subr.bf16.mxu0 0
        %852 = vmatpush1.bf16.msra.mxu0 0
        %853 = vmatprep.subr.bf16.mxu0 0
        %854 = vmatpush1.bf16.msra.mxu0 0
        %855 = vmatprep.subr.bf16.mxu0 0
        %856 = vmatpush1.bf16.msra.mxu0 0
        %857 = vmatprep.subr.bf16.mxu0 0
        %858 = vmatpush1.bf16.msra.mxu0 0
        %859 = vmatprep.subr.bf16.mxu0 0
        %860 = vmatpush1.bf16.msra.mxu0 0
        %861 = vmatprep.subr.bf16.mxu0 0
        %862 = vmatpush1.bf16.msra.mxu0 0
        %863 = vmatprep.mubr.bf16.mxu0 0
        %864 = vmatmul.mubr.bf16.gmra.mrb[0].mxu0 %v257
        %v865 = vpop.f32.mrb[0].mxu0
        %v866 = vadd.f32 0.0, %v865
        %v867 = vpop.f32.mrb[0].mxu0
        %v868 = vpop.f32.mrb[0].mxu0
        %v869 = vpop.f32.mrb[0].mxu0
        %870 = vdwg.mxu0
        %v871 = vpack.c.bf16 %v294, %v294
        %v872 = vpack.c.bf16 %v346, %v346
        %v873 = vpack.c.bf16 %v398, %v398
        %v874 = vpack.c.bf16 %v450, %v450
        %v875 = vpack.c.bf16 %v502, %v502
        %v876 = vpack.c.bf16 %v554, %v554
        %v877 = vpack.c.bf16 %v606, %v606
        %v878 = vpack.c.bf16 %v658, %v658
        %v879 = vpack.c.bf16 %v710, %v710
        %v880 = vpack.c.bf16 %v762, %v762
        %v881 = vpack.c.bf16 %v814, %v814
        %v882 = vpack.c.bf16 %v866, %v866
        %vm883 = vcmask 64512
        %v885 = vsel %vm883, %v871, 0
        %v888 = vsel %vm883, %v875, 0
        %890 = vmatprep.subr.bf16.mxu0 0
        %891 = vmatpush1.bf16.xpose.msra.mxu0 %v888
        %892 = vmatprep.subr.bf16.mxu0 0
        %893 = vmatpush1.bf16.xpose.msra.mxu0 0
        %894 = vmatprep.subr.bf16.mxu0 0
        %895 = vmatpush1.bf16.xpose.msra.mxu0 0
        %896 = vmatprep.subr.bf16.mxu0 0
        %897 = vmatpush1.bf16.xpose.msra.mxu0 0
        %898 = vmatprep.subr.bf16.mxu0 0
        %899 = vmatpush1.bf16.xpose.msra.mxu0 0
        %900 = vmatprep.subr.bf16.mxu0 0
        %901 = vmatpush1.bf16.xpose.msra.mxu0 0
        %902 = vmatprep.subr.bf16.mxu0 0
        %903 = vmatpush1.bf16.xpose.msra.mxu0 0
        %904 = vmatprep.subr.bf16.mxu0 0
        %905 = vmatpush1.bf16.xpose.msra.mxu0 0
        %906 = vmatprep.subr.bf16.mxu0 0
        %907 = vmatpush1.bf16.xpose.msra.mxu0 0
        %908 = vmatprep.subr.bf16.mxu0 0
        %909 = vmatpush1.bf16.xpose.msra.mxu0 0
        %910 = vmatprep.subr.bf16.mxu0 0
        %911 = vmatpush1.bf16.xpose.msra.mxu0 0
        %912 = vmatprep.subr.bf16.mxu0 0
        %913 = vmatpush1.bf16.xpose.msra.mxu0 0
        %914 = vmatprep.subr.bf16.mxu0 0
        %915 = vmatpush1.bf16.xpose.msra.mxu0 0
        %916 = vmatprep.subr.bf16.mxu0 0
        %917 = vmatpush1.bf16.xpose.msra.mxu0 0
        %918 = vmatprep.subr.bf16.mxu0 0
        %919 = vmatpush1.bf16.xpose.msra.mxu0 0
        %920 = vmatprep.subr.bf16.mxu0 0
        %921 = vmatpush1.bf16.xpose.msra.mxu0 0
        %922 = vmatprep.mubr.bf16.mxu0 0
        %923 = vmatmul.mubr.bf16.gmra.mrb[0].mxu0 %v885
        %v924 = vpop.f32.mrb[0].mxu0
        %v925 = vadd.f32 0.0, %v924
        %v926 = vpop.f32.mrb[0].mxu0
        %v927 = vpop.f32.mrb[0].mxu0
        %v928 = vpop.f32.mrb[0].mxu0
        %929 = vdwg.mxu0
        %v931 = vsel %vm883, %v872, 0
        %v934 = vsel %vm883, %v876, 0
        %936 = vmatprep.subr.bf16.mxu0 0
        %937 = vmatpush1.bf16.xpose.msra.mxu0 %v934
        %938 = vmatprep.subr.bf16.mxu0 0
        %939 = vmatpush1.bf16.xpose.msra.mxu0 0
        %940 = vmatprep.subr.bf16.mxu0 0
        %941 = vmatpush1.bf16.xpose.msra.mxu0 0
        %942 = vmatprep.subr.bf16.mxu0 0
        %943 = vmatpush1.bf16.xpose.msra.mxu0 0
        %944 = vmatprep.subr.bf16.mxu0 0
        %945 = vmatpush1.bf16.xpose.msra.mxu0 0
        %946 = vmatprep.subr.bf16.mxu0 0
        %947 = vmatpush1.bf16.xpose.msra.mxu0 0
        %948 = vmatprep.subr.bf16.mxu0 0
        %949 = vmatpush1.bf16.xpose.msra.mxu0 0
        %950 = vmatprep.subr.bf16.mxu0 0
        %951 = vmatpush1.bf16.xpose.msra.mxu0 0
        %952 = vmatprep.subr.bf16.mxu0 0
        %953 = vmatpush1.bf16.xpose.msra.mxu0 0
        %954 = vmatprep.subr.bf16.mxu0 0
        %955 = vmatpush1.bf16.xpose.msra.mxu0 0
        %956 = vmatprep.subr.bf16.mxu0 0
        %957 = vmatpush1.bf16.xpose.msra.mxu0 0
        %958 = vmatprep.subr.bf16.mxu0 0
        %959 = vmatpush1.bf16.xpose.msra.mxu0 0
        %960 = vmatprep.subr.bf16.mxu0 0
        %961 = vmatpush1.bf16.xpose.msra.mxu0 0
        %962 = vmatprep.subr.bf16.mxu0 0
        %963 = vmatpush1.bf16.xpose.msra.mxu0 0
        %964 = vmatprep.subr.bf16.mxu0 0
        %965 = vmatpush1.bf16.xpose.msra.mxu0 0
        %966 = vmatprep.subr.bf16.mxu0 0
        %967 = vmatpush1.bf16.xpose.msra.mxu0 0
        %968 = vmatprep.mubr.bf16.mxu0 0
        %969 = vmatmul.mubr.bf16.gmra.mrb[0].mxu0 %v931
        %v970 = vpop.f32.mrb[0].mxu0
        %v971 = vadd.f32 0.0, %v970
        %v972 = vpop.f32.mrb[0].mxu0
        %v973 = vpop.f32.mrb[0].mxu0
        %v974 = vpop.f32.mrb[0].mxu0
        %975 = vdwg.mxu0
        %v977 = vsel %vm883, %v873, 0
        %v980 = vsel %vm883, %v877, 0
        %982 = vmatprep.subr.bf16.mxu0 0
        %983 = vmatpush1.bf16.xpose.msra.mxu0 %v980
        %984 = vmatprep.subr.bf16.mxu0 0
        %985 = vmatpush1.bf16.xpose.msra.mxu0 0
        %986 = vmatprep.subr.bf16.mxu0 0
        %987 = vmatpush1.bf16.xpose.msra.mxu0 0
        %988 = vmatprep.subr.bf16.mxu0 0
        %989 = vmatpush1.bf16.xpose.msra.mxu0 0
        %990 = vmatprep.subr.bf16.mxu0 0
        %991 = vmatpush1.bf16.xpose.msra.mxu0 0
        %992 = vmatprep.subr.bf16.mxu0 0
        %993 = vmatpush1.bf16.xpose.msra.mxu0 0
        %994 = vmatprep.subr.bf16.mxu0 0
        %995 = vmatpush1.bf16.xpose.msra.mxu0 0
        %996 = vmatprep.subr.bf16.mxu0 0
        %997 = vmatpush1.bf16.xpose.msra.mxu0 0
        %998 = vmatprep.subr.bf16.mxu0 0
        %999 = vmatpush1.bf16.xpose.msra.mxu0 0
        %1000 = vmatprep.subr.bf16.mxu0 0
        %1001 = vmatpush1.bf16.xpose.msra.mxu0 0
        %1002 = vmatprep.subr.bf16.mxu0 0
        %1003 = vmatpush1.bf16.xpose.msra.mxu0 0
        %1004 = vmatprep.subr.bf16.mxu0 0
        %1005 = vmatpush1.bf16.xpose.msra.mxu0 0
        %1006 = vmatprep.subr.bf16.mxu0 0
        %1007 = vmatpush1.bf16.xpose.msra.mxu0 0
        %1008 = vmatprep.subr.bf16.mxu0 0
        %1009 = vmatpush1.bf16.xpose.msra.mxu0 0
        %1010 = vmatprep.subr.bf16.mxu0 0
        %1011 = vmatpush1.bf16.xpose.msra.mxu0 0
        %1012 = vmatprep.subr.bf16.mxu0 0
        %1013 = vmatpush1.bf16.xpose.msra.mxu0 0
        %1014 = vmatprep.mubr.bf16.mxu0 0
        %1015 = vmatmul.mubr.bf16.gmra.mrb[0].mxu0 %v977
        %v1016 = vpop.f32.mrb[0].mxu0
        %v1017 = vadd.f32 0.0, %v1016
        %v1018 = vpop.f32.mrb[0].mxu0
        %v1019 = vpop.f32.mrb[0].mxu0
        %v1020 = vpop.f32.mrb[0].mxu0
        %1021 = vdwg.mxu0
        %v1023 = vsel %vm883, %v874, 0
        %v1026 = vsel %vm883, %v878, 0
        %1028 = vmatprep.subr.bf16.mxu0 0
        %1029 = vmatpush1.bf16.xpose.msra.mxu0 %v1026
        %1030 = vmatprep.subr.bf16.mxu0 0
        %1031 = vmatpush1.bf16.xpose.msra.mxu0 0
        %1032 = vmatprep.subr.bf16.mxu0 0
        %1033 = vmatpush1.bf16.xpose.msra.mxu0 0
        %1034 = vmatprep.subr.bf16.mxu0 0
        %1035 = vmatpush1.bf16.xpose.msra.mxu0 0
        %1036 = vmatprep.subr.bf16.mxu0 0
        %1037 = vmatpush1.bf16.xpose.msra.mxu0 0
        %1038 = vmatprep.subr.bf16.mxu0 0
        %1039 = vmatpush1.bf16.xpose.msra.mxu0 0
        %1040 = vmatprep.subr.bf16.mxu0 0
        %1041 = vmatpush1.bf16.xpose.msra.mxu0 0
        %1042 = vmatprep.subr.bf16.mxu0 0
        %1043 = vmatpush1.bf16.xpose.msra.mxu0 0
        %1044 = vmatprep.subr.bf16.mxu0 0
        %1045 = vmatpush1.bf16.xpose.msra.mxu0 0
        %1046 = vmatprep.subr.bf16.mxu0 0
        %1047 = vmatpush1.bf16.xpose.msra.mxu0 0
        %1048 = vmatprep.subr.bf16.mxu0 0
        %1049 = vmatpush1.bf16.xpose.msra.mxu0 0
        %1050 = vmatprep.subr.bf16.mxu0 0
        %1051 = vmatpush1.bf16.xpose.msra.mxu0 0
        %1052 = vmatprep.subr.bf16.mxu0 0
        %1053 = vmatpush1.bf16.xpose.msra.mxu0 0
        %1054 = vmatprep.subr.bf16.mxu0 0
        %1055 = vmatpush1.bf16.xpose.msra.mxu0 0
        %1056 = vmatprep.subr.bf16.mxu0 0
        %1057 = vmatpush1.bf16.xpose.msra.mxu0 0
        %1058 = vmatprep.subr.bf16.mxu0 0
        %1059 = vmatpush1.bf16.xpose.msra.mxu0 0
        %1060 = vmatprep.mubr.bf16.mxu0 0
        %1061 = vmatmul.mubr.bf16.gmra.mrb[0].mxu0 %v1023
        %v1062 = vpop.f32.mrb[0].mxu0
        %v1063 = vadd.f32 0.0, %v1062
        %v1064 = vpop.f32.mrb[0].mxu0
        %v1065 = vpop.f32.mrb[0].mxu0
        %v1066 = vpop.f32.mrb[0].mxu0
        %1067 = vdwg.mxu0
        %v1068 = vmul.f32 %v925, 0.35355338
        %v1069 = vmul.f32 %v971, 0.35355338
        %v1070 = vmul.f32 %v1017, 0.35355338
        %v1071 = vmul.f32 %v1063, 0.35355338
        %v1072 = vlaneseq
        %v1073 = vshrl.u32 %v1072, 7
        %v1074 = vlaneseq
        %v1075 = vand.u32 %v1074, 127
        %vm1076 = vcmp.le.s32.totalorder %v1075, %v1073
        %v1077 = vsel %vm1076, 1, 0
        %vm1078 = vcmp.eq.s32.totalorder %v1077, 1
        %v1079 = vsel %vm1078, %v1068, -1e+30
        %v1080 = vsel %vm1078, %v1069, -1e+30
        %v1081 = vsel %vm1078, %v1070, -1e+30
        %v1082 = vsel %vm1078, %v1071, -1e+30
        %v1083 = vsel %vm883, %v1079, -inf
        %1084 = vmax.xlane.f32.xlu0 %v1083
        %v1085 = vpop.xlane.xlu0 %1084
        %v1086 = vsel %vm883, %v1080, -inf
        %1087 = vmax.xlane.f32.xlu0 %v1086
        %v1088 = vpop.xlane.xlu0 %1087
        %v1089 = vsel %vm883, %v1081, -inf
        %1090 = vmax.xlane.f32.xlu0 %v1089
        %v1091 = vpop.xlane.xlu0 %1090
        %v1092 = vsel %vm883, %v1082, -inf
        %1093 = vmax.xlane.f32.xlu0 %v1092
        %v1094 = vpop.xlane.xlu0 %1093
        %v1095 = vsub.f32 %v1079, %v1085
        %v1096 = vsub.f32 %v1080, %v1088
        %v1097 = vsub.f32 %v1081, %v1091
        %v1098 = vsub.f32 %v1082, %v1094
        %v1099 = vmul.f32 %v1095, 1.442695
        %v1100 = vpow.pop %v1099
        %v1101 = vmul.f32 %v1096, 1.442695
        %v1102 = vpow.pop %v1101
        %v1103 = vmul.f32 %v1097, 1.442695
        %v1104 = vpow.pop %v1103
        %v1105 = vmul.f32 %v1098, 1.442695
        %v1106 = vpow.pop %v1105
        %v1107 = vsel %vm883, %v1100, 0.0
        %1108 = vadd.xlane.f32.xlu0 %v1107
        %v1109 = vpop.xlane.xlu0 %1108
        %v1110 = vsel %vm883, %v1102, 0.0
        %1111 = vadd.xlane.f32.xlu0 %v1110
        %v1112 = vpop.xlane.xlu0 %1111
        %v1113 = vsel %vm883, %v1104, 0.0
        %1114 = vadd.xlane.f32.xlu0 %v1113
        %v1115 = vpop.xlane.xlu0 %1114
        %v1116 = vsel %vm883, %v1106, 0.0
        %1117 = vadd.xlane.f32.xlu0 %v1116
        %v1118 = vpop.xlane.xlu0 %1117
        %v1119 = vrcp.pop %v1109
        %v1120 = vrcp.pop %v1112
        %v1121 = vrcp.pop %v1115
        %v1122 = vrcp.pop %v1118
        %v1123 = vmul.f32 %v1100, %v1119
        %v1124 = vmul.f32 %v1102, %v1120
        %v1125 = vmul.f32 %v1104, %v1121
        %v1126 = vmul.f32 %v1106, %v1122
        %v1127 = vpack.c.bf16 %v1123, %v1123
        %v1128 = vpack.c.bf16 %v1124, %v1124
        %v1129 = vpack.c.bf16 %v1125, %v1125
        %v1130 = vpack.c.bf16 %v1126, %v1126
        %v1132 = vsel %vm883, %v1127, 0
        %vm1134 = vcmask 1043456
        %v1136 = vsel %vm1134, %v879, 0
        %1138 = vmatprep.subr.bf16.mxu0 0
        %1139 = vmatpush1.bf16.msra.mxu0 %v1136
        %1140 = vmatprep.subr.bf16.mxu0 0
        %1141 = vmatpush1.bf16.msra.mxu0 0
        %1142 = vmatprep.subr.bf16.mxu0 0
        %1143 = vmatpush1.bf16.msra.mxu0 0
        %1144 = vmatprep.subr.bf16.mxu0 0
        %1145 = vmatpush1.bf16.msra.mxu0 0
        %1146 = vmatprep.subr.bf16.mxu0 0
        %1147 = vmatpush1.bf16.msra.mxu0 0
        %1148 = vmatprep.subr.bf16.mxu0 0
        %1149 = vmatpush1.bf16.msra.mxu0 0
        %1150 = vmatprep.subr.bf16.mxu0 0
        %1151 = vmatpush1.bf16.msra.mxu0 0
        %1152 = vmatprep.subr.bf16.mxu0 0
        %1153 = vmatpush1.bf16.msra.mxu0 0
        %1154 = vmatprep.subr.bf16.mxu0 0
        %1155 = vmatpush1.bf16.msra.mxu0 0
        %1156 = vmatprep.subr.bf16.mxu0 0
        %1157 = vmatpush1.bf16.msra.mxu0 0
        %1158 = vmatprep.subr.bf16.mxu0 0
        %1159 = vmatpush1.bf16.msra.mxu0 0
        %1160 = vmatprep.subr.bf16.mxu0 0
        %1161 = vmatpush1.bf16.msra.mxu0 0
        %1162 = vmatprep.subr.bf16.mxu0 0
        %1163 = vmatpush1.bf16.msra.mxu0 0
        %1164 = vmatprep.subr.bf16.mxu0 0
        %1165 = vmatpush1.bf16.msra.mxu0 0
        %1166 = vmatprep.subr.bf16.mxu0 0
        %1167 = vmatpush1.bf16.msra.mxu0 0
        %1168 = vmatprep.subr.bf16.mxu0 0
        %1169 = vmatpush1.bf16.msra.mxu0 0
        %1170 = vmatprep.mubr.bf16.mxu0 0
        %1171 = vmatmul.mubr.bf16.gmra.mrb[0].mxu0 %v1132
        %v1172 = vpop.f32.mrb[0].mxu0
        %v1173 = vadd.f32 0.0, %v1172
        %v1174 = vpop.f32.mrb[0].mxu0
        %v1175 = vpop.f32.mrb[0].mxu0
        %v1176 = vpop.f32.mrb[0].mxu0
        %1177 = vdwg.mxu0
        %v1179 = vsel %vm883, %v1128, 0
        %v1182 = vsel %vm1134, %v880, 0
        %1184 = vmatprep.subr.bf16.mxu0 0
        %1185 = vmatpush1.bf16.msra.mxu0 %v1182
        %1186 = vmatprep.subr.bf16.mxu0 0
        %1187 = vmatpush1.bf16.msra.mxu0 0
        %1188 = vmatprep.subr.bf16.mxu0 0
        %1189 = vmatpush1.bf16.msra.mxu0 0
        %1190 = vmatprep.subr.bf16.mxu0 0
        %1191 = vmatpush1.bf16.msra.mxu0 0
        %1192 = vmatprep.subr.bf16.mxu0 0
        %1193 = vmatpush1.bf16.msra.mxu0 0
        %1194 = vmatprep.subr.bf16.mxu0 0
        %1195 = vmatpush1.bf16.msra.mxu0 0
        %1196 = vmatprep.subr.bf16.mxu0 0
        %1197 = vmatpush1.bf16.msra.mxu0 0
        %1198 = vmatprep.subr.bf16.mxu0 0
        %1199 = vmatpush1.bf16.msra.mxu0 0
        %1200 = vmatprep.subr.bf16.mxu0 0
        %1201 = vmatpush1.bf16.msra.mxu0 0
        %1202 = vmatprep.subr.bf16.mxu0 0
        %1203 = vmatpush1.bf16.msra.mxu0 0
        %1204 = vmatprep.subr.bf16.mxu0 0
        %1205 = vmatpush1.bf16.msra.mxu0 0
        %1206 = vmatprep.subr.bf16.mxu0 0
        %1207 = vmatpush1.bf16.msra.mxu0 0
        %1208 = vmatprep.subr.bf16.mxu0 0
        %1209 = vmatpush1.bf16.msra.mxu0 0
        %1210 = vmatprep.subr.bf16.mxu0 0
        %1211 = vmatpush1.bf16.msra.mxu0 0
        %1212 = vmatprep.subr.bf16.mxu0 0
        %1213 = vmatpush1.bf16.msra.mxu0 0
        %1214 = vmatprep.subr.bf16.mxu0 0
        %1215 = vmatpush1.bf16.msra.mxu0 0
        %1216 = vmatprep.mubr.bf16.mxu0 0
        %1217 = vmatmul.mubr.bf16.gmra.mrb[0].mxu0 %v1179
        %v1218 = vpop.f32.mrb[0].mxu0
        %v1219 = vadd.f32 0.0, %v1218
        %v1220 = vpop.f32.mrb[0].mxu0
        %v1221 = vpop.f32.mrb[0].mxu0
        %v1222 = vpop.f32.mrb[0].mxu0
        %1223 = vdwg.mxu0
        %v1225 = vsel %vm883, %v1129, 0
        %v1228 = vsel %vm1134, %v881, 0
        %1230 = vmatprep.subr.bf16.mxu0 0
        %1231 = vmatpush1.bf16.msra.mxu0 %v1228
        %1232 = vmatprep.subr.bf16.mxu0 0
        %1233 = vmatpush1.bf16.msra.mxu0 0
        %1234 = vmatprep.subr.bf16.mxu0 0
        %1235 = vmatpush1.bf16.msra.mxu0 0
        %1236 = vmatprep.subr.bf16.mxu0 0
        %1237 = vmatpush1.bf16.msra.mxu0 0
        %1238 = vmatprep.subr.bf16.mxu0 0
        %1239 = vmatpush1.bf16.msra.mxu0 0
        %1240 = vmatprep.subr.bf16.mxu0 0
        %1241 = vmatpush1.bf16.msra.mxu0 0
        %1242 = vmatprep.subr.bf16.mxu0 0
        %1243 = vmatpush1.bf16.msra.mxu0 0
        %1244 = vmatprep.subr.bf16.mxu0 0
        %1245 = vmatpush1.bf16.msra.mxu0 0
        %1246 = vmatprep.subr.bf16.mxu0 0
        %1247 = vmatpush1.bf16.msra.mxu0 0
        %1248 = vmatprep.subr.bf16.mxu0 0
        %1249 = vmatpush1.bf16.msra.mxu0 0
        %1250 = vmatprep.subr.bf16.mxu0 0
        %1251 = vmatpush1.bf16.msra.mxu0 0
        %1252 = vmatprep.subr.bf16.mxu0 0
        %1253 = vmatpush1.bf16.msra.mxu0 0
        %1254 = vmatprep.subr.bf16.mxu0 0
        %1255 = vmatpush1.bf16.msra.mxu0 0
        %1256 = vmatprep.subr.bf16.mxu0 0
        %1257 = vmatpush1.bf16.msra.mxu0 0
        %1258 = vmatprep.subr.bf16.mxu0 0
        %1259 = vmatpush1.bf16.msra.mxu0 0
        %1260 = vmatprep.subr.bf16.mxu0 0
        %1261 = vmatpush1.bf16.msra.mxu0 0
        %1262 = vmatprep.mubr.bf16.mxu0 0
        %1263 = vmatmul.mubr.bf16.gmra.mrb[0].mxu0 %v1225
        %v1264 = vpop.f32.mrb[0].mxu0
        %v1265 = vadd.f32 0.0, %v1264
        %v1266 = vpop.f32.mrb[0].mxu0
        %v1267 = vpop.f32.mrb[0].mxu0
        %v1268 = vpop.f32.mrb[0].mxu0
        %1269 = vdwg.mxu0
        %v1271 = vsel %vm883, %v1130, 0
        %v1274 = vsel %vm1134, %v882, 0
        %1276 = vmatprep.subr.bf16.mxu0 0
        %1277 = vmatpush1.bf16.msra.mxu0 %v1274
        %1278 = vmatprep.subr.bf16.mxu0 0
        %1279 = vmatpush1.bf16.msra.mxu0 0
        %1280 = vmatprep.subr.bf16.mxu0 0
        %1281 = vmatpush1.bf16.msra.mxu0 0
        %1282 = vmatprep.subr.bf16.mxu0 0
        %1283 = vmatpush1.bf16.msra.mxu0 0
        %1284 = vmatprep.subr.bf16.mxu0 0
        %1285 = vmatpush1.bf16.msra.mxu0 0
        %1286 = vmatprep.subr.bf16.mxu0 0
        %1287 = vmatpush1.bf16.msra.mxu0 0
        %1288 = vmatprep.subr.bf16.mxu0 0
        %1289 = vmatpush1.bf16.msra.mxu0 0
        %1290 = vmatprep.subr.bf16.mxu0 0
        %1291 = vmatpush1.bf16.msra.mxu0 0
        %1292 = vmatprep.subr.bf16.mxu0 0
        %1293 = vmatpush1.bf16.msra.mxu0 0
        %1294 = vmatprep.subr.bf16.mxu0 0
        %1295 = vmatpush1.bf16.msra.mxu0 0
        %1296 = vmatprep.subr.bf16.mxu0 0
        %1297 = vmatpush1.bf16.msra.mxu0 0
        %1298 = vmatprep.subr.bf16.mxu0 0
        %1299 = vmatpush1.bf16.msra.mxu0 0
        %1300 = vmatprep.subr.bf16.mxu0 0
        %1301 = vmatpush1.bf16.msra.mxu0 0
        %1302 = vmatprep.subr.bf16.mxu0 0
        %1303 = vmatpush1.bf16.msra.mxu0 0
        %1304 = vmatprep.subr.bf16.mxu0 0
        %1305 = vmatpush1.bf16.msra.mxu0 0
        %1306 = vmatprep.subr.bf16.mxu0 0
        %1307 = vmatpush1.bf16.msra.mxu0 0
        %1308 = vmatprep.mubr.bf16.mxu0 0
        %1309 = vmatmul.mubr.bf16.gmra.mrb[0].mxu0 %v1271
        %v1310 = vpop.f32.mrb[0].mxu0
        %v1311 = vadd.f32 0.0, %v1310
        %v1312 = vpop.f32.mrb[0].mxu0
        %v1313 = vpop.f32.mrb[0].mxu0
        %v1314 = vpop.f32.mrb[0].mxu0
        %1315 = vdwg.mxu0
        %v1316 = vpack.c.bf16 %v1173, %v1173
        %v1317 = vpack.c.bf16 %v1219, %v1219
        %v1318 = vpack.c.bf16 %v1265, %v1265
        %v1319 = vpack.c.bf16 %v1311, %v1311
        %v1320 = vld [vmem:[%s2] sm:$0xf]
        %v1321 = vld [vmem:[%s2 + $0x4] sm:$0xf]
        %v1322 = vld [vmem:[%s2 + $0x8] sm:$0xf]
        %v1323 = vld [vmem:[%s2 + $0xc] sm:$0xf]
        %v1325 = vsel %vm883, %v1316, 0
        %v1328 = vsel %vm1134, %v1320, 0
        %1330 = vmatprep.subr.bf16.mxu0 0
        %1331 = vmatpush1.bf16.msra.mxu0 %v1328
        %1332 = vmatprep.subr.bf16.mxu0 0
        %1333 = vmatpush1.bf16.msra.mxu0 0
        %1334 = vmatprep.subr.bf16.mxu0 0
        %1335 = vmatpush1.bf16.msra.mxu0 0
        %1336 = vmatprep.subr.bf16.mxu0 0
        %1337 = vmatpush1.bf16.msra.mxu0 0
        %1338 = vmatprep.subr.bf16.mxu0 0
        %1339 = vmatpush1.bf16.msra.mxu0 0
        %1340 = vmatprep.subr.bf16.mxu0 0
        %1341 = vmatpush1.bf16.msra.mxu0 0
        %1342 = vmatprep.subr.bf16.mxu0 0
        %1343 = vmatpush1.bf16.msra.mxu0 0
        %1344 = vmatprep.subr.bf16.mxu0 0
        %1345 = vmatpush1.bf16.msra.mxu0 0
        %1346 = vmatprep.subr.bf16.mxu0 0
        %1347 = vmatpush1.bf16.msra.mxu0 0
        %1348 = vmatprep.subr.bf16.mxu0 0
        %1349 = vmatpush1.bf16.msra.mxu0 0
        %1350 = vmatprep.subr.bf16.mxu0 0
        %1351 = vmatpush1.bf16.msra.mxu0 0
        %1352 = vmatprep.subr.bf16.mxu0 0
        %1353 = vmatpush1.bf16.msra.mxu0 0
        %1354 = vmatprep.subr.bf16.mxu0 0
        %1355 = vmatpush1.bf16.msra.mxu0 0
        %1356 = vmatprep.subr.bf16.mxu0 0
        %1357 = vmatpush1.bf16.msra.mxu0 0
        %1358 = vmatprep.subr.bf16.mxu0 0
        %1359 = vmatpush1.bf16.msra.mxu0 0
        %1360 = vmatprep.subr.bf16.mxu0 0
        %1361 = vmatpush1.bf16.msra.mxu0 0
        %1362 = vmatprep.mubr.bf16.mxu0 0
        %1363 = vmatmul.mubr.bf16.gmra.mrb[0].mxu0 %v1325
        %v1364 = vpop.f32.mrb[0].mxu0
        %v1365 = vadd.f32 0.0, %v1364
        %v1366 = vpop.f32.mrb[0].mxu0
        %v1367 = vpop.f32.mrb[0].mxu0
        %v1368 = vpop.f32.mrb[0].mxu0
        %1369 = vdwg.mxu0
        %v1371 = vsel %vm883, %v1317, 0
        %v1374 = vsel %vm1134, %v1321, 0
        %1376 = vmatprep.subr.bf16.mxu0 0
        %1377 = vmatpush1.bf16.msra.mxu0 %v1374
        %1378 = vmatprep.subr.bf16.mxu0 0
        %1379 = vmatpush1.bf16.msra.mxu0 0
        %1380 = vmatprep.subr.bf16.mxu0 0
        %1381 = vmatpush1.bf16.msra.mxu0 0
        %1382 = vmatprep.subr.bf16.mxu0 0
        %1383 = vmatpush1.bf16.msra.mxu0 0
        %1384 = vmatprep.subr.bf16.mxu0 0
        %1385 = vmatpush1.bf16.msra.mxu0 0
        %1386 = vmatprep.subr.bf16.mxu0 0
        %1387 = vmatpush1.bf16.msra.mxu0 0
        %1388 = vmatprep.subr.bf16.mxu0 0
        %1389 = vmatpush1.bf16.msra.mxu0 0
        %1390 = vmatprep.subr.bf16.mxu0 0
        %1391 = vmatpush1.bf16.msra.mxu0 0
        %1392 = vmatprep.subr.bf16.mxu0 0
        %1393 = vmatpush1.bf16.msra.mxu0 0
        %1394 = vmatprep.subr.bf16.mxu0 0
        %1395 = vmatpush1.bf16.msra.mxu0 0
        %1396 = vmatprep.subr.bf16.mxu0 0
        %1397 = vmatpush1.bf16.msra.mxu0 0
        %1398 = vmatprep.subr.bf16.mxu0 0
        %1399 = vmatpush1.bf16.msra.mxu0 0
        %1400 = vmatprep.subr.bf16.mxu0 0
        %1401 = vmatpush1.bf16.msra.mxu0 0
        %1402 = vmatprep.subr.bf16.mxu0 0
        %1403 = vmatpush1.bf16.msra.mxu0 0
        %1404 = vmatprep.subr.bf16.mxu0 0
        %1405 = vmatpush1.bf16.msra.mxu0 0
        %1406 = vmatprep.subr.bf16.mxu0 0
        %1407 = vmatpush1.bf16.msra.mxu0 0
        %1408 = vmatprep.mubr.bf16.mxu0 0
        %1409 = vmatmul.mubr.bf16.gmra.mrb[0].mxu0 %v1371
        %v1410 = vpop.f32.mrb[0].mxu0
        %v1411 = vadd.f32 0.0, %v1410
        %v1412 = vpop.f32.mrb[0].mxu0
        %v1413 = vpop.f32.mrb[0].mxu0
        %v1414 = vpop.f32.mrb[0].mxu0
        %1415 = vdwg.mxu0
        %v1417 = vsel %vm883, %v1318, 0
        %v1420 = vsel %vm1134, %v1322, 0
        %1422 = vmatprep.subr.bf16.mxu0 0
        %1423 = vmatpush1.bf16.msra.mxu0 %v1420
        %1424 = vmatprep.subr.bf16.mxu0 0
        %1425 = vmatpush1.bf16.msra.mxu0 0
        %1426 = vmatprep.subr.bf16.mxu0 0
        %1427 = vmatpush1.bf16.msra.mxu0 0
        %1428 = vmatprep.subr.bf16.mxu0 0
        %1429 = vmatpush1.bf16.msra.mxu0 0
        %1430 = vmatprep.subr.bf16.mxu0 0
        %1431 = vmatpush1.bf16.msra.mxu0 0
        %1432 = vmatprep.subr.bf16.mxu0 0
        %1433 = vmatpush1.bf16.msra.mxu0 0
        %1434 = vmatprep.subr.bf16.mxu0 0
        %1435 = vmatpush1.bf16.msra.mxu0 0
        %1436 = vmatprep.subr.bf16.mxu0 0
        %1437 = vmatpush1.bf16.msra.mxu0 0
        %1438 = vmatprep.subr.bf16.mxu0 0
        %1439 = vmatpush1.bf16.msra.mxu0 0
        %1440 = vmatprep.subr.bf16.mxu0 0
        %1441 = vmatpush1.bf16.msra.mxu0 0
        %1442 = vmatprep.subr.bf16.mxu0 0
        %1443 = vmatpush1.bf16.msra.mxu0 0
        %1444 = vmatprep.subr.bf16.mxu0 0
        %1445 = vmatpush1.bf16.msra.mxu0 0
        %1446 = vmatprep.subr.bf16.mxu0 0
        %1447 = vmatpush1.bf16.msra.mxu0 0
        %1448 = vmatprep.subr.bf16.mxu0 0
        %1449 = vmatpush1.bf16.msra.mxu0 0
        %1450 = vmatprep.subr.bf16.mxu0 0
        %1451 = vmatpush1.bf16.msra.mxu0 0
        %1452 = vmatprep.subr.bf16.mxu0 0
        %1453 = vmatpush1.bf16.msra.mxu0 0
        %1454 = vmatprep.mubr.bf16.mxu0 0
        %1455 = vmatmul.mubr.bf16.gmra.mrb[0].mxu0 %v1417
        %v1456 = vpop.f32.mrb[0].mxu0
        %v1457 = vadd.f32 0.0, %v1456
        %v1458 = vpop.f32.mrb[0].mxu0
        %v1459 = vpop.f32.mrb[0].mxu0
        %v1460 = vpop.f32.mrb[0].mxu0
        %1461 = vdwg.mxu0
        %v1463 = vsel %vm883, %v1319, 0
        %v1466 = vsel %vm1134, %v1323, 0
        %1468 = vmatprep.subr.bf16.mxu0 0
        %1469 = vmatpush1.bf16.msra.mxu0 %v1466
        %1470 = vmatprep.subr.bf16.mxu0 0
        %1471 = vmatpush1.bf16.msra.mxu0 0
        %1472 = vmatprep.subr.bf16.mxu0 0
        %1473 = vmatpush1.bf16.msra.mxu0 0
        %1474 = vmatprep.subr.bf16.mxu0 0
        %1475 = vmatpush1.bf16.msra.mxu0 0
        %1476 = vmatprep.subr.bf16.mxu0 0
        %1477 = vmatpush1.bf16.msra.mxu0 0
        %1478 = vmatprep.subr.bf16.mxu0 0
        %1479 = vmatpush1.bf16.msra.mxu0 0
        %1480 = vmatprep.subr.bf16.mxu0 0
        %1481 = vmatpush1.bf16.msra.mxu0 0
        %1482 = vmatprep.subr.bf16.mxu0 0
        %1483 = vmatpush1.bf16.msra.mxu0 0
        %1484 = vmatprep.subr.bf16.mxu0 0
        %1485 = vmatpush1.bf16.msra.mxu0 0
        %1486 = vmatprep.subr.bf16.mxu0 0
        %1487 = vmatpush1.bf16.msra.mxu0 0
        %1488 = vmatprep.subr.bf16.mxu0 0
        %1489 = vmatpush1.bf16.msra.mxu0 0
        %1490 = vmatprep.subr.bf16.mxu0 0
        %1491 = vmatpush1.bf16.msra.mxu0 0
        %1492 = vmatprep.subr.bf16.mxu0 0
        %1493 = vmatpush1.bf16.msra.mxu0 0
        %1494 = vmatprep.subr.bf16.mxu0 0
        %1495 = vmatpush1.bf16.msra.mxu0 0
        %1496 = vmatprep.subr.bf16.mxu0 0
        %1497 = vmatpush1.bf16.msra.mxu0 0
        %1498 = vmatprep.subr.bf16.mxu0 0
        %1499 = vmatpush1.bf16.msra.mxu0 0
        %1500 = vmatprep.mubr.bf16.mxu0 0
        %1501 = vmatmul.mubr.bf16.gmra.mrb[0].mxu0 %v1463
        %v1502 = vpop.f32.mrb[0].mxu0
        %v1503 = vadd.f32 0.0, %v1502
        %v1504 = vpop.f32.mrb[0].mxu0
        %v1505 = vpop.f32.mrb[0].mxu0
        %v1506 = vpop.f32.mrb[0].mxu0
        %1507 = vdwg.mxu0
        %v1508 = vsel %vm255, %v1365, 0.0
        %v1509 = vsel %vm255, %v1411, 0.0
        %v1510 = vadd.f32 %v1508, %v1509
        %v1511 = vsel %vm255, %v1457, 0.0
        %v1512 = vadd.f32 %v1510, %v1511
        %v1513 = vsel %vm255, %v1503, 0.0
        %v1514 = vadd.f32 %v1512, %v1513
        %v1515 = vld [vmem:[%s3] sm:$0x1]
        %v1517 = vlaneseq
        %v1518 = vshrl.u32 %v1517, 7
        %v1519 = vsub.s32 0, %v1518
        %v1520 = vrot.slane %v1515, %v1519
        %v1522 = vadd.f32 %v1514, %v1520
        %1523 = vst.msk [vmem:[%s188] sm:$0xff] %vm255, %v1522
        %s1524 = sand.u32 %s115, 1
        %s1525 = scalar_lea.sflag [#allocation3], %s1524
        %s1526 = sand.u32 %s115, 1
        %s1527 = smul.addr %s1526, 8
        %s1528 = scalar_lea.vmem [#allocation2], %s1527
        // Predicated region
        $region37: #{mha_pallas.1} parent=35 // pred_check
          %p1529 = pneg %p125
        $region38: #{mha_pallas.1} parent=35 // pred_check_branch
          %1531 = sbr.rel (%p1529) target = $region40
        $region39: #{mha_pallas.1} parent=35 // pred_region
          %s1533 = ssub.s32 128, 128
          %1534 = vsyncadd %s1525, %s1533
          %s1535 = smul.addr %s18, 128
          %s1536 = scalar_lea.hbm %s4, %s1535
          %s1538 = sshll.u32 %s1528, 4
          %s1539 = int_to_ptr.vmem [resolvable:$true] %s1538
          %1541 = dma.vmem_to_hbm [thread:$0]  %s1539, 128, %s1536, %s1525
        $region40: #{mha_pallas.1} parent=35 // pred_fallthru
          _
      $region36: #{mha_pallas.1} parent=5 // pred_fallthru
        _
      %p1542 = scmp.le.s32.totalorder 2, %s13
      // Predicated region
      $region41: #{mha_pallas.1} parent=5 // pred_check
        %p1543 = pneg %p1542
      $region42: #{mha_pallas.1} parent=5 // pred_check_branch
        %1545 = sbr.rel (%p1543) target = $region44
      $region43: #{mha_pallas.1} parent=5 // pred_region
        %s1546 = ssub.s32 %s13, 2
        // Predicated region
        $region45: #{mha_pallas.1} parent=43 // pred_check
          %p1547 = pneg %p131
        $region46: #{mha_pallas.1} parent=43 // pred_check_branch
          %1549 = sbr.rel (%p1547) target = $region48
        $region47: #{mha_pallas.1} parent=43 // pred_region
          %s1550 = sand.u32 %s116, 1
          %s1551 = scalar_lea.sflag [#allocation3], %s1550
          %s1552 = sand.u32 %s116, 1
          %s1553 = smul.addr %s1552, 8
          %s1554 = scalar_lea.vmem [#allocation2], %s1553
          %1555 = dma.done %s1551, 128
        $region48: #{mha_pallas.1} parent=43 // pred_fallthru
          _
      $region44: #{mha_pallas.1} parent=5 // pred_fallthru
        _
    $region6: #{mha_pallas.1} parent=1 // loop_footer
      %s17 = sadd.s32 1, %s13
    $region7: #{mha_pallas.1} parent=1 // loop_footer_branch
      %12 = sbr.rel target = $region3
    $region8: #{mha_pallas.1} parent=1 // loop_exit
      _
    %1556 = vsyncpa [#allocation3], 1
    %s1557 = scalar_lea.sflag [#allocation3], 1
    %1558 = vsyncpa %s1557, 1

</llo_original>
